<compile_context>
chip_gen: v7x
topology: tpu7x:2x2x1
jax: 0.10.0
libtpu: 0.0.40
codegen_flags: <defaults>
</compile_context>

<pallas_src>
import functools

import jax
import jax.numpy as jnp
from jax import lax
from jax.experimental import pallas as pl
from jax.experimental.pallas import tpu as pltpu

_BIG = 3.0e38  # "+inf"-like sentinel that survives f32 adds without NaNs.


def _round_up(n: int, m: int) -> int:
    return ((n + m - 1) // m) * m


def _chamfer_kernel(x_ref, y_ref, out_ref, rowmin_ref, colmin_ref, *,
                    nx, ny, t_nx, t_ny, pad_rows, pad_cols):
    """Grid = (B, ni, nj), j innermost.

    x_ref      : (1, t_nx, k_aug)   augmented gts tile   (M, K)
    y_ref      : (1, k_aug, t_ny)   augmented preds tile (K, N), lane-dense
    out_ref    : (1, 2, 128)        per-batch [sum col-mins | sum row-mins]
    rowmin_ref : (t_nx, 128)        lane-group running row-min (reset per i)
    colmin_ref : (nj_pad, t_ny)     running col-min per j tile (persists over i)
    """
    i = pl.program_id(1)
    j = pl.program_id(2)
    ni = pl.num_programs(1)
    nj = pl.num_programs(2)

    # ---- per-batch / per-row / per-column accumulator init ----
    @pl.when(jnp.logical_and(i == 0, j == 0))
    def _():
        out_ref[...] = jnp.zeros_like(out_ref)

    @pl.when(j == 0)
    def _():
        rowmin_ref[...] = jnp.full_like(rowmin_ref, _BIG)

    @pl.when(i == 0)
    def _():
        colmin_ref[pl.ds(j, 1), :] = jnp.full((1, t_ny), _BIG, jnp.float32)

    # ---- one MXU matmul gives the full distance tile ----
    #   P = x_aug @ y_augT = ||x||^2 + ||y||^2 - 2<x, y>
    p = lax.dot_general(
        x_ref[0], y_ref[0], (((1,), (0,)), ((), ())),
        precision=lax.Precision.HIGHEST,
        preferred_element_type=jnp.float32)                       # (t_nx, t_ny)

    # ---- deferred row-min: pure-VPU lane-group fold (XLU reduce at flush) ----
    m = p[:, 0:128]
    for g in range(1, t_ny // 128):
        m = jnp.minimum(m, p[:, g * 128:(g + 1) * 128])
    rowmin_ref[...] = jnp.minimum(rowmin_ref[...], m)

    # ---- running column-min (min over Nx), accumulated across i ----
    tile_colmin = jnp.min(p, axis=0, keepdims=True)                # (1, t_ny)
    colmin_ref[pl.ds(j, 1), :] = jnp.minimum(colmin_ref[pl.ds(j, 1), :],
                                             tile_colmin)

    # ---- flush the completed row-min block into the per-batch sum ----
    @pl.when(j == nj - 1)
    def _():
        rm = jnp.min(rowmin_ref[...], axis=1, keepdims=True)       # (t_nx, 1)
        if pad_rows:  # static flag; padded rows only exist in the last i tile
            valid = (i * t_nx
                     + lax.broadcasted_iota(jnp.int32, (t_nx, 1), 0)) < nx
            rm = jnp.where(valid, rm, 0.0)
        rs = jnp.sum(rm, axis=0, keepdims=True)                    # (1, 1)
        out_ref[0, 1:2, :] = out_ref[0, 1:2, :] + rs               # torch mins_2

    # ---- flush the completed column-min block into the per-batch sum ----
    @pl.when(i == ni - 1)
    def _():
        cm = colmin_ref[pl.ds(j, 1), :]                            # (1, t_ny)
        if pad_cols:  # static flag
            valid = (j * t_ny
                     + lax.broadcasted_iota(jnp.int32, (1, t_ny), 1)) < ny
            cm = jnp.where(valid, cm, 0.0)
        cs = jnp.sum(cm, axis=1, keepdims=True)                    # (1, 1)
        out_ref[0, 0:1, :] = out_ref[0, 0:1, :] + cs               # torch mins_1


def _augment(gts_f32, preds_f32, nx_pad, ny_pad, k_aug):
    """Build augmented operands once, outside the tile loop (O(B*N*8) work)."""
    b, nx, d = gts_f32.shape
    _, ny, _ = preds_f32.shape
    f32 = jnp.float32

    # LHS (B, Nx_pad, k_aug) = [-2*x | ||x||^2 | 1 | 0..]; pad rows: [0|_BIG|0|0]
    rx = jnp.sum(gts_f32 * gts_f32, axis=-1, keepdims=True)        # (B, Nx, 1)
    x_aug = jnp.concatenate(
        [-2.0 * gts_f32, rx, jnp.ones_like(rx),
         jnp.zeros((b, nx, k_aug - d - 2), f32)], axis=-1)         # (B, Nx, k_aug)
    if nx_pad > nx:
        pad = jnp.zeros((b, nx_pad - nx, k_aug), f32).at[:, :, d].set(_BIG)
        x_aug = jnp.concatenate([x_aug, pad], axis=1)

    # RHS lane-dense (B, k_aug, Ny_pad) = [y^T ; 1 ; ||y||^2 ; 0..];
    # pad cols: [0; 0; _BIG; 0]
    ry = jnp.sum(preds_f32 * preds_f32, axis=-1)[:, None, :]       # (B, 1, Ny)
    y_aug_t = jnp.concatenate(
        [jnp.swapaxes(preds_f32, 1, 2), jnp.ones_like(ry), ry,
         jnp.zeros((b, k_aug - d - 2, ny), f32)], axis=1)          # (B, k_aug, Ny)
    if ny_pad > ny:
        pad = jnp.zeros((b, k_aug, ny_pad - ny), f32).at[:, d + 1, :].set(_BIG)
        y_aug_t = jnp.concatenate([y_aug_t, pad], axis=2)
    return x_aug, y_aug_t


@functools.partial(jax.jit, static_argnames=("mode",))
def chamfer_loss(preds, gts, mode="sum"):
    """Pallas TPU equivalent of ChamferLoss.forward(preds, gts, mode)."""
    b, ny, d = preds.shape
    bx, nx, dx = gts.shape
    assert b == bx and d == dx
    if mode not in ("sum", "mean"):
        raise ValueError(f"unsupported mode: {mode}")

    # Tile choice: p tile = t_nx * t_ny * 4B = 2 MiB -> fits v7x (64 MiB VMEM)
    # while amortizing the ~0.35us/step overhead on v5e/v6e; t_ny (lane dim) is
    # the larger one so reductions/stores stay lane-dense.
    t_nx = min(512, _round_up(nx, 8))
    t_ny = min(1024, _round_up(ny, 128))
    nx_pad = _round_up(nx, t_nx)
    ny_pad = _round_up(ny, t_ny)
    ni = nx_pad // t_nx
    nj = ny_pad // t_ny
    nj_pad = _round_up(nj, 8)
    k_aug = _round_up(d + 2, 8)       # augmented contraction width (D=3 -> 8)

    x_aug, y_aug_t = _augment(gts.astype(jnp.float32),
                              preds.astype(jnp.float32),
                              nx_pad, ny_pad, k_aug)

    kernel = functools.partial(
        _chamfer_kernel, nx=nx, ny=ny, t_nx=t_nx, t_ny=t_ny,
        pad_rows=nx_pad > nx, pad_cols=ny_pad > ny)

    # VMEM budget from the actual footprint (double-buffered inputs, lane /
    # sublane padding included) + headroom for the f32 matmul temporaries.
    vmem_bytes = (2 * t_nx * 128 * 4          # LHS blocks (lanes pad 8 -> 128)
                  + 2 * k_aug * t_ny * 4      # RHS blocks (lane-dense)
                  + 2 * 8 * 128 * 4           # out block
                  + t_nx * 128 * 4            # row-min scratch
                  + nj_pad * t_ny * 4         # col-min scratch
                  + 3 * t_nx * t_ny * 4)      # p tile + matmul temporaries
    vmem_limit = int(min(64 * 1024 * 1024,
                         max(32 * 1024 * 1024, vmem_bytes + (8 << 20))))

    partials = pl.pallas_call(
        kernel,
        out_shape=jax.ShapeDtypeStruct((b, 2, 128), jnp.float32),
        grid_spec=pltpu.PrefetchScalarGridSpec(
            num_scalar_prefetch=0,
            grid=(b, ni, nj),
            in_specs=[
                pl.BlockSpec((1, t_nx, k_aug), lambda bb, i, j: (bb, i, 0)),
                pl.BlockSpec((1, k_aug, t_ny), lambda bb, i, j: (bb, 0, j)),
            ],
            out_specs=pl.BlockSpec((1, 2, 128), lambda bb, i, j: (bb, 0, 0)),
            scratch_shapes=[
                pltpu.VMEM((t_nx, 128), jnp.float32),      # deferred row mins
                pltpu.VMEM((nj_pad, t_ny), jnp.float32),   # running col mins
            ],
        ),
        compiler_params=pltpu.CompilerParams(
            dimension_semantics=("parallel", "arbitrary", "arbitrary"),
            vmem_limit_bytes=vmem_limit,
        ),
    )(x_aug, y_aug_t)   # (B, 2, 128): lane-replicated per-batch partial sums

    sum_1 = jnp.sum(partials[:, 0, 0])   # sum over (b, j) of min_i P
    sum_2 = jnp.sum(partials[:, 1, 0])   # sum over (b, i) of min_j P

    if mode == "mean":
        return sum_1 / (b * ny) + sum_2 / (b * nx)
    return sum_1 + sum_2


def _reference_chamfer(preds, gts, mode="sum"):
    # Pure-JAX reference mirroring the PyTorch module (f32 matmul).
    x = gts.astype(jnp.float32)
    y = preds.astype(jnp.float32)
    xx = jnp.sum(x * x, axis=-1)                          # (B, Nx)
    yy = jnp.sum(y * y, axis=-1)                          # (B, Ny)
    zz = jnp.einsum("bnd,bmd->bnm", x, y,
                    precision=lax.Precision.HIGHEST)      # (B, Nx, Ny)
    dist = xx[:, :, None] + yy[:, None, :] - 2.0 * zz
    mins_1 = jnp.min(dist, axis=1)
    mins_2 = jnp.min(dist, axis=2)
    if mode == "mean":
        return jnp.mean(mins_1) + jnp.mean(mins_2)
    return jnp.sum(mins_1) + jnp.sum(mins_2)


if __name__ == "__main__":
    key = jax.random.PRNGKey(0)
    k1, k2, k3, k4, k5, k6 = jax.random.split(key, 6)
    D = 3

    # Case 1: small clouds, exact single tile per batch element.
    B, N = 2, 128
    preds = jax.random.normal(k1, (B, N, D), dtype=jnp.float32)
    gts = jax.random.normal(k2, (B, N, D), dtype=jnp.float32)
    for mode in ("sum", "mean"):
        out = chamfer_loss(preds, gts, mode=mode)
        jax.block_until_ready(out)
        ref = _reference_chamfer(preds, gts, mode=mode)
        assert jnp.allclose(out, ref, rtol=1e-4, atol=1e-3), (mode, out, ref)

    # Case 2: Nx != Ny -> multiple i tiles + padded rows and columns.
    preds2 = jax.random.normal(k3, (1, 520, D), dtype=jnp.float32)
    gts2 = jax.random.normal(k4, (1, 600, D), dtype=jnp.float32)
    out2 = chamfer_loss(preds2, gts2, mode="sum")
    jax.block_until_ready(out2)
    ref2 = _reference_chamfer(preds2, gts2, mode="sum")
    assert jnp.allclose(out2, ref2, rtol=1e-4, atol=1e-3), (out2, ref2)

    # Case 3: nj > 1 -> exercises the dynamically indexed col-min scratch and
    # multi-j row-min accumulation.
    preds3 = jax.random.normal(k5, (1, 1100, D), dtype=jnp.float32)
    gts3 = jax.random.normal(k6, (1, 700, D), dtype=jnp.float32)
    out3 = chamfer_loss(preds3, gts3, mode="mean")
    jax.block_until_ready(out3)
    ref3 = _reference_chamfer(preds3, gts3, mode="mean")
    assert jnp.allclose(out3, ref3, rtol=1e-4, atol=1e-3), (out3, ref3)

    print("KERNEL_OK")
</pallas_src>

<mosaic_0001>
module attributes {stable_mosaic.version = 11 : i64} {
  func.func @_chamfer_kernel(%arg0: i32, %arg1: i32, %arg2: i32, %arg3: memref<1x128x8xf32, #tpu.memory_space<vmem>>, %arg4: memref<1x8x128xf32, #tpu.memory_space<vmem>>, %arg5: memref<1x2x128xf32, #tpu.memory_space<vmem>>, %arg6: memref<128x128xf32, #tpu.memory_space<vmem>>, %arg7: memref<8x128xf32, #tpu.memory_space<vmem>>) attributes {dimension_semantics = [#tpu.dimension_semantics<parallel>, #tpu.dimension_semantics<arbitrary>, #tpu.dimension_semantics<arbitrary>], iteration_bounds = array<i64: 2, 1, 1>, scalar_prefetch = 0 : i64, scratch_operands = 2 : i64, tpu.core_type = #tpu.core_type<tc>, window_params = [{transform_indices = @transform_0, window_bounds = array<i64: 1, 128, 8>}, {transform_indices = @transform_1, window_bounds = array<i64: 1, 8, 128>}, {transform_indices = @transform_2, window_bounds = array<i64: 1, 2, 128>}]} {
    %c0_i32 = arith.constant 0 : i32
    %0 = arith.cmpi eq, %arg1, %c0_i32 : i32
    %c0_i32_0 = arith.constant 0 : i32
    %1 = arith.cmpi eq, %arg2, %c0_i32_0 : i32
    %2 = arith.andi %0, %1 : i1
    %3 = arith.extui %2 : i1 to i32
    %c0_i32_1 = arith.constant 0 : i32
    %4 = arith.cmpi ne, %3, %c0_i32_1 : i32
    scf.if %4 {
      %cst_22 = arith.constant 0.000000e+00 : f32
      %32 = vector.broadcast %cst_22 : f32 to vector<1x2x128xf32>
      %c0_23 = arith.constant 0 : index
      %c0_24 = arith.constant 0 : index
      %c0_25 = arith.constant 0 : index
      %33 = vector.load %arg5[%c0_23, %c0_24, %c0_25] : memref<1x2x128xf32, #tpu.memory_space<vmem>>, vector<1x2x128xf32>
      tpu.vector_store %arg5[%c0_23, %c0_24, %c0_25], %32 {strides = array<i32>} : memref<1x2x128xf32, #tpu.memory_space<vmem>>, vector<1x2x128xf32>,
    } else {
    }
    %c0_i32_2 = arith.constant 0 : i32
    %5 = arith.cmpi eq, %arg2, %c0_i32_2 : i32
    %6 = arith.extui %5 : i1 to i32
    %c0_i32_3 = arith.constant 0 : i32
    %7 = arith.cmpi ne, %6, %c0_i32_3 : i32
    scf.if %7 {
      %cst_22 = arith.constant 3.000000e+38 : f32
      %32 = vector.broadcast %cst_22 : f32 to vector<128x128xf32>
      %c0_23 = arith.constant 0 : index
      %c0_24 = arith.constant 0 : index
      %33 = vector.load %arg6[%c0_23, %c0_24] : memref<128x128xf32, #tpu.memory_space<vmem>>, vector<128x128xf32>
      tpu.vector_store %arg6[%c0_23, %c0_24], %32 {strides = array<i32>} : memref<128x128xf32, #tpu.memory_space<vmem>>, vector<128x128xf32>,
    } else {
    }
    %c0_i32_4 = arith.constant 0 : i32
    %8 = arith.cmpi eq, %arg1, %c0_i32_4 : i32
    %9 = arith.extui %8 : i1 to i32
    %c0_i32_5 = arith.constant 0 : i32
    %10 = arith.cmpi ne, %9, %c0_i32_5 : i32
    scf.if %10 {
      %cst_22 = arith.constant 3.000000e+38 : f32
      %32 = vector.broadcast %cst_22 : f32 to vector<1x128xf32>
      %33 = arith.index_cast %arg2 : i32 to index
      %c0_23 = arith.constant 0 : index
      %34 = vector.load %arg7[%33, %c0_23] : memref<8x128xf32, #tpu.memory_space<vmem>>, vector<1x128xf32>
      tpu.vector_store %arg7[%33, %c0_23], %32 {strides = array<i32>} : memref<8x128xf32, #tpu.memory_space<vmem>>, vector<1x128xf32>,
    } else {
    }
    %c0 = arith.constant 0 : index
    %c0_6 = arith.constant 0 : index
    %c0_7 = arith.constant 0 : index
    %11 = vector.load %arg3[%c0, %c0_6, %c0_7] : memref<1x128x8xf32, #tpu.memory_space<vmem>>, vector<1x128x8xf32>
    %12 = vector.shape_cast %11 : vector<1x128x8xf32> to vector<128x8xf32>
    %c0_8 = arith.constant 0 : index
    %c0_9 = arith.constant 0 : index
    %c0_10 = arith.constant 0 : index
    %13 = vector.load %arg4[%c0_8, %c0_9, %c0_10] : memref<1x8x128xf32, #tpu.memory_space<vmem>>, vector<1x8x128xf32>
    %14 = vector.shape_cast %13 : vector<1x8x128xf32> to vector<8x128xf32>
    %cst = arith.constant dense<0.000000e+00> : vector<128x128xf32>
    %15 = tpu.matmul %12, %14, %cst {dimension_numbers = #tpu.dot_dimension_numbers<[1], [0], [0], [1], [0, 0, 1, 1], [], []>, precision = #tpu.contract_precision<fp32>} : vector<128x8xf32>, vector<8x128xf32>, vector<128x128xf32> -> vector<128x128xf32>
    %c0_11 = arith.constant 0 : index
    %c0_12 = arith.constant 0 : index
    %16 = vector.load %arg6[%c0_11, %c0_12] : memref<128x128xf32, #tpu.memory_space<vmem>>, vector<128x128xf32>
    %17 = arith.minimumf %16, %15 : vector<128x128xf32>
    %c0_13 = arith.constant 0 : index
    %c0_14 = arith.constant 0 : index
    %18 = vector.load %arg6[%c0_13, %c0_14] : memref<128x128xf32, #tpu.memory_space<vmem>>, vector<128x128xf32>
    tpu.vector_store %arg6[%c0_13, %c0_14], %17 {strides = array<i32>} : memref<128x128xf32, #tpu.memory_space<vmem>>, vector<128x128xf32>,
    %cst_15 = arith.constant dense<0x7F800000> : vector<128xf32>
    %19 = vector.multi_reduction <minimumf>, %15, %cst_15 [0] : vector<128x128xf32> to vector<128xf32>
    %20 = vector.shape_cast %19 : vector<128xf32> to vector<1x128xf32>
    %21 = arith.index_cast %arg2 : i32 to index
    %c0_16 = arith.constant 0 : index
    %22 = vector.load %arg7[%21, %c0_16] : memref<8x128xf32, #tpu.memory_space<vmem>>, vector<1x128xf32>
    %23 = arith.minimumf %22, %20 : vector<1x128xf32>
    %24 = arith.index_cast %arg2 : i32 to index
    %c0_17 = arith.constant 0 : index
    %25 = vector.load %arg7[%24, %c0_17] : memref<8x128xf32, #tpu.memory_space<vmem>>, vector<1x128xf32>
    tpu.vector_store %arg7[%24, %c0_17], %23 {strides = array<i32>} : memref<8x128xf32, #tpu.memory_space<vmem>>, vector<1x128xf32>,
    %c0_i32_18 = arith.constant 0 : i32
    %26 = arith.cmpi eq, %arg2, %c0_i32_18 : i32
    %27 = arith.extui %26 : i1 to i32
    %c0_i32_19 = arith.constant 0 : i32
    %28 = arith.cmpi ne, %27, %c0_i32_19 : i32
    scf.if %28 {
      %c0_22 = arith.constant 0 : index
      %c0_23 = arith.constant 0 : index
      %32 = vector.load %arg6[%c0_22, %c0_23] : memref<128x128xf32, #tpu.memory_space<vmem>>, vector<128x128xf32>
      %cst_24 = arith.constant dense<0x7F800000> : vector<128xf32>
      %33 = vector.multi_reduction <minimumf>, %32, %cst_24 [1] : vector<128x128xf32> to vector<128xf32>
      %34 = vector.shape_cast %33 : vector<128xf32> to vector<128x1xf32>
      %cst_25 = arith.constant dense<0.000000e+00> : vector<1xf32>
      %35 = vector.multi_reduction <add>, %34, %cst_25 [0] : vector<128x1xf32> to vector<1xf32>
      %36 = vector.shape_cast %35 : vector<1xf32> to vector<1x1xf32>
      %c0_26 = arith.constant 0 : index
      %c1 = arith.constant 1 : index
      %c0_27 = arith.constant 0 : index
      %37 = vector.load %arg5[%c0_26, %c1, %c0_27] : memref<1x2x128xf32, #tpu.memory_space<vmem>>, vector<1x1x128xf32>
      %38 = vector.shape_cast %37 : vector<1x1x128xf32> to vector<1x128xf32>
      %39 = vector.broadcast %36 : vector<1x1xf32> to vector<1x128xf32>
      %40 = arith.addf %38, %39 : vector<1x128xf32>
      %c0_28 = arith.constant 0 : index
      %c1_29 = arith.constant 1 : index
      %c0_30 = arith.constant 0 : index
      %41 = vector.load %arg5[%c0_28, %c1_29, %c0_30] : memref<1x2x128xf32, #tpu.memory_space<vmem>>, vector<1x1x128xf32>
      %42 = vector.shape_cast %41 : vector<1x1x128xf32> to vector<1x128xf32>
      %43 = vector.shape_cast %40 : vector<1x128xf32> to vector<1x1x128xf32>
      tpu.vector_store %arg5[%c0_28, %c1_29, %c0_30], %43 {strides = array<i32>} : memref<1x2x128xf32, #tpu.memory_space<vmem>>, vector<1x1x128xf32>,
    } else {
    }
    %c0_i32_20 = arith.constant 0 : i32
    %29 = arith.cmpi eq, %arg1, %c0_i32_20 : i32
    %30 = arith.extui %29 : i1 to i32
    %c0_i32_21 = arith.constant 0 : i32
    %31 = arith.cmpi ne, %30, %c0_i32_21 : i32
    scf.if %31 {
      %32 = arith.index_cast %arg2 : i32 to index
      %c0_22 = arith.constant 0 : index
      %33 = vector.load %arg7[%32, %c0_22] : memref<8x128xf32, #tpu.memory_space<vmem>>, vector<1x128xf32>
      %cst_23 = arith.constant dense<0.000000e+00> : vector<1xf32>
      %34 = vector.multi_reduction <add>, %33, %cst_23 [1] : vector<1x128xf32> to vector<1xf32>
      %35 = vector.shape_cast %34 : vector<1xf32> to vector<1x1xf32>
      %c0_24 = arith.constant 0 : index
      %c0_25 = arith.constant 0 : index
      %c0_26 = arith.constant 0 : index
      %36 = vector.load %arg5[%c0_24, %c0_25, %c0_26] : memref<1x2x128xf32, #tpu.memory_space<vmem>>, vector<1x1x128xf32>
      %37 = vector.shape_cast %36 : vector<1x1x128xf32> to vector<1x128xf32>
      %38 = vector.broadcast %35 : vector<1x1xf32> to vector<1x128xf32>
      %39 = arith.addf %37, %38 : vector<1x128xf32>
      %c0_27 = arith.constant 0 : index
      %c0_28 = arith.constant 0 : index
      %c0_29 = arith.constant 0 : index
      %40 = vector.load %arg5[%c0_27, %c0_28, %c0_29] : memref<1x2x128xf32, #tpu.memory_space<vmem>>, vector<1x1x128xf32>
      %41 = vector.shape_cast %40 : vector<1x1x128xf32> to vector<1x128xf32>
      %42 = vector.shape_cast %39 : vector<1x128xf32> to vector<1x1x128xf32>
      tpu.vector_store %arg5[%c0_27, %c0_28, %c0_29], %42 {strides = array<i32>} : memref<1x2x128xf32, #tpu.memory_space<vmem>>, vector<1x1x128xf32>,
    } else {
    }
    return
  }
  func.func @transform_0(%arg0: i32, %arg1: i32, %arg2: i32) -> (i32, i32, i32) {
    %c0_i32 = arith.constant 0 : i32
    %c0_i32_0 = arith.constant 0 : i32
    return %arg0, %arg1, %c0_i32 : i32, i32, i32
  }
  func.func @transform_1(%arg0: i32, %arg1: i32, %arg2: i32) -> (i32, i32, i32) {
    %c0_i32 = arith.constant 0 : i32
    %c0_i32_0 = arith.constant 0 : i32
    return %arg0, %c0_i32, %arg2 : i32, i32, i32
  }
  func.func @transform_2(%arg0: i32, %arg1: i32, %arg2: i32) -> (i32, i32, i32) {
    %c0_i32 = arith.constant 0 : i32
    %c0_i32_0 = arith.constant 0 : i32
    %c0_i32_1 = arith.constant 0 : i32
    return %arg0, %c0_i32, %c0_i32_0 : i32, i32, i32
  }
}

</mosaic_0001>

<llo_original>
// kernel: chamfer_loss.1
$region0: #{chamfer_loss.1}
  #allocation0 [shape = 'u32[]', space=smem, size = 0x4, offset = 0x4, fixed_abs, tag = 'smem constant byte address 0x4 - core index']
  #allocation1 [shape = 'u32[144,128]{1,0:T(1,128)}', space=vmem, size = 0x12000, scoped, tag = 'internal scratch']
  #allocation2 [shape = 'f32[128,128]{1,0:T(8,128)}', space=vmem, size = 0x10000, scoped, tag = 'scratch operand']
  #allocation3 [shape = 'f32[8,128]{1,0:T(8,128)}', space=vmem, size = 0x1000, scoped, tag = 'scratch operand']
  %s0 = inlined_call_operand.vmem [shape: f32[2,128,8], index: 0, kind: input, shape index: {}]
  %s1 = inlined_call_operand.vmem [shape: f32[2,8,128], index: 1, kind: input, shape index: {}]
  %s2 = inlined_call_operand.vmem [shape: f32[2,2,128], index: 2, kind: output, shape index: {}]
  %s3 = sld [smem:[#allocation0]]
  $region61: #{chamfer_loss.1} parent=0
    _
  %s5 = ssub.s32 1, %s3
  %s6 = scalar_select 0, %s5, %s3
  loop: start=0, step=1, limit=4
  $region2: #{chamfer_loss.1} parent=0 // loop_pre_header
    _
  $region3: #{chamfer_loss.1} parent=0 // loop_header
    %s8 = sphi 0, %s12
    %p9 = scmp.ge.s32.totalorder %s8, 4
    %s15 = sphi 0, %s34
    %s16 = sphi 0, %s30
    %s17 = sphi 0, %s26
    %s18 = sphi 0, %s15
    %s19 = sphi 0, %s16
    %s20 = sphi 0, %s17
    %s21 = sphi 0, %s18
    %s22 = sphi 0, %s19
    %s23 = sphi 0, %s20
    %s39 = sphi 0, %s41
    %s42 = sphi 0, %s39
    %s43 = sphi 0, %s42
    %s59 = sphi 0, %s43
    %s67 = sphi 0, %s69
    %s70 = sphi 0, %s67
    %s71 = sphi 0, %s70
    %s87 = sphi 0, %s71
    %s93 = sphi 0, %s95
    %s96 = sphi 0, %s93
    %s97 = sphi 0, %s96
    %s113 = sphi 0, %s97
  $region4: #{chamfer_loss.1} parent=0 // loop_header_branch
    %11 = sbr.rel (%p9) target = $region8
  $region5: #{chamfer_loss.1} parent=0 // loop_body
    %s13 = ssub.s32 %s8, 1
    %s14 = ssub.s32 %s8, 2
    %s24 = sadd.s32 1, %s17
    %p25 = scmp.ge.s32.totalorder %s24, 1
    %s26 = scalar_select %p25, 0, %s24
    %s27 = sadd.s32 1, %s16
    %s28 = scalar_select %p25, %s27, %s16
    %p29 = scmp.ge.s32.totalorder %s28, 1
    %s30 = scalar_select %p29, 0, %s28
    %s31 = sadd.s32 1, %s15
    %s32 = scalar_select %p29, %s31, %s15
    %p33 = scmp.ge.s32.totalorder %s32, 2
    %s34 = scalar_select %p33, 0, %s32
    %s35 = ssub.s32 %s15, %s34
    %s36 = ssub.s32 %s16, %s30
    %s37 = sor.u32 %s35, %s36
    %p38 = scmp.eq.s32.totalorder %s37, 0
    %s40 = sadd.s32 %s39, 1
    %s41 = scalar_select %p38, %s39, %s40
    %p44 = pneg %p38
    %p45 = scmp.eq.s32.totalorder %s8, 1
    %p46 = por %p44, %p45
    %p47 = scmp.ne.s32.totalorder %s39, %s42
    %p48 = scmp.eq.s32.totalorder %s8, 0
    %p49 = por %p47, %p48
    %p50 = scmp.ne.s32.totalorder %s39, %s42
    %p51 = scmp.eq.s32.totalorder %s13, 1
    %p52 = por %p50, %p51
    %p53 = scmp.ne.s32.totalorder %s42, %s43
    %p54 = scmp.eq.s32.totalorder %s13, 0
    %p55 = por %p53, %p54
    %p56 = scmp.ne.s32.totalorder %s42, %s43
    %p57 = scmp.eq.s32.totalorder %s14, 1
    %p58 = por %p56, %p57
    %p60 = scmp.ne.s32.totalorder %s43, %s59
    %p61 = scmp.eq.s32.totalorder %s14, 0
    %p62 = por %p60, %p61
    %s63 = ssub.s32 %s15, %s34
    %s64 = ssub.s32 %s17, %s26
    %s65 = sor.u32 %s63, %s64
    %p66 = scmp.eq.s32.totalorder %s65, 0
    %s68 = sadd.s32 %s67, 1
    %s69 = scalar_select %p66, %s67, %s68
    %p72 = pneg %p66
    %p73 = scmp.eq.s32.totalorder %s8, 1
    %p74 = por %p72, %p73
    %p75 = scmp.ne.s32.totalorder %s67, %s70
    %p76 = scmp.eq.s32.totalorder %s8, 0
    %p77 = por %p75, %p76
    %p78 = scmp.ne.s32.totalorder %s67, %s70
    %p79 = scmp.eq.s32.totalorder %s13, 1
    %p80 = por %p78, %p79
    %p81 = scmp.ne.s32.totalorder %s70, %s71
    %p82 = scmp.eq.s32.totalorder %s13, 0
    %p83 = por %p81, %p82
    %p84 = scmp.ne.s32.totalorder %s70, %s71
    %p85 = scmp.eq.s32.totalorder %s14, 1
    %p86 = por %p84, %p85
    %p88 = scmp.ne.s32.totalorder %s71, %s87
    %p89 = scmp.eq.s32.totalorder %s14, 0
    %p90 = por %p88, %p89
    %s91 = ssub.s32 %s15, %s34
    %p92 = scmp.eq.s32.totalorder %s91, 0
    %s94 = sadd.s32 %s93, 1
    %s95 = scalar_select %p92, %s93, %s94
    %p98 = pneg %p92
    %p99 = scmp.eq.s32.totalorder %s8, 1
    %p100 = por %p98, %p99
    %p101 = scmp.ne.s32.totalorder %s93, %s96
    %p102 = scmp.eq.s32.totalorder %s8, 0
    %p103 = por %p101, %p102
    %p104 = scmp.ne.s32.totalorder %s93, %s96
    %p105 = scmp.eq.s32.totalorder %s13, 1
    %p106 = por %p104, %p105
    %p107 = scmp.ne.s32.totalorder %s96, %s97
    %p108 = scmp.eq.s32.totalorder %s13, 0
    %p109 = por %p107, %p108
    %p110 = scmp.ne.s32.totalorder %s96, %s97
    %p111 = scmp.eq.s32.totalorder %s14, 1
    %p112 = por %p110, %p111
    %p114 = scmp.ne.s32.totalorder %s97, %s113
    %p115 = scmp.eq.s32.totalorder %s14, 0
    %p116 = por %p114, %p115
    %p117 = scmp.le.s32.totalorder 1, %s8
    %p118 = scmp.lt.s32.totalorder %s8, 3
    %p119 = pnand %p117, %p118
    %p120 = pneg %p119
    // Predicated region
    $region9: #{chamfer_loss.1} parent=5 // pred_check
      _
    $region10: #{chamfer_loss.1} parent=5 // pred_check_branch
      %122 = sbr.rel (%p119) target = $region12
    $region11: #{chamfer_loss.1} parent=5 // pred_region
      %s123 = ssub.s32 %s8, 1
    $region12: #{chamfer_loss.1} parent=5 // pred_fallthru
      _
    %p124 = scmp.lt.s32.totalorder %s8, 2
    // Predicated region
    $region13: #{chamfer_loss.1} parent=5 // pred_check
      %p125 = pneg %p124
    $region14: #{chamfer_loss.1} parent=5 // pred_check_branch
      %127 = sbr.rel (%p125) target = $region16
    $region15: #{chamfer_loss.1} parent=5 // pred_region
      // Predicated region
      $region17: #{chamfer_loss.1} parent=15 // pred_check
        %p128 = pneg %p49
      $region18: #{chamfer_loss.1} parent=15 // pred_check_branch
        %130 = sbr.rel (%p128) target = $region20
      $region19: #{chamfer_loss.1} parent=15 // pred_region
        %s131 = smul.u32 16, %s16
        %p132 = scmp.lt.s32.totalorder %s15, 1
        %s133 = scalar_select %p132, %s15, 1
        %p134 = scmp.lt.s32.totalorder %s131, 15
        %s135 = scalar_select %p134, %s131, 15
        %s136 = smul.addr %s133, 16
        %s137 = sadd.s32 %s135, %s136
        %s138 = smul.addr %s137, 8
        %s139 = scalar_lea.vmem %s0, %s138
        %s140 = smul.u32 16, %s16
      $region20: #{chamfer_loss.1} parent=15 // pred_fallthru
        _
      // Predicated region
      $region21: #{chamfer_loss.1} parent=15 // pred_check
        %p141 = pneg %p77
      $region22: #{chamfer_loss.1} parent=15 // pred_check_branch
        %143 = sbr.rel (%p141) target = $region24
      $region23: #{chamfer_loss.1} parent=15 // pred_region
        %p144 = scmp.lt.s32.totalorder %s15, 1
        %s145 = scalar_select %p144, %s15, 1
        %p146 = scmp.lt.s32.totalorder %s17, 0
        %s147 = scalar_select %p146, %s17, 0
        %s148 = sadd.s32 %s147, %s145
        %s149 = smul.addr %s148, 8
        %s150 = scalar_lea.vmem %s1, %s149
      $region24: #{chamfer_loss.1} parent=15 // pred_fallthru
        _
    $region16: #{chamfer_loss.1} parent=5 // pred_fallthru
      _
    %p151 = scmp.le.s32.totalorder 1, %s8
    %p152 = scmp.lt.s32.totalorder %s8, 3
    %p153 = pnand %p151, %p152
    %p154 = pneg %p153
    // Predicated region
    $region25: #{chamfer_loss.1} parent=5 // pred_check
      _
    $region26: #{chamfer_loss.1} parent=5 // pred_check_branch
      %156 = sbr.rel (%p153) target = $region28
    $region27: #{chamfer_loss.1} parent=5 // pred_region
      %s157 = ssub.s32 %s8, 1
      %s158 = smul.u32 16, %s19
      %p159 = scmp.lt.s32.totalorder %s18, 1
      %s160 = scalar_select %p159, %s18, 1
      %p161 = scmp.lt.s32.totalorder %s158, 15
      %s162 = scalar_select %p161, %s158, 15
      %s163 = smul.addr %s160, 16
      %s164 = sadd.s32 %s162, %s163
      %s165 = smul.addr %s164, 8
      %s166 = scalar_lea.vmem %s0, %s165
      %p167 = pneg %p55
      %p168 = pneg %p52
      %p169 = scmp.lt.s32.totalorder %s18, 1
      %s170 = scalar_select %p169, %s18, 1
      %p171 = scmp.lt.s32.totalorder %s20, 0
      %s172 = scalar_select %p171, %s20, 0
      %s173 = sadd.s32 %s172, %s170
      %s174 = smul.addr %s173, 8
      %s175 = scalar_lea.vmem %s1, %s174
      %p176 = pneg %p83
      %p177 = pneg %p80
      %p178 = pneg %p109
      %p179 = pneg %p106
      %p180 = scmp.lt.s32.totalorder %s18, 1
      %s181 = scalar_select %p180, %s18, 1
      %s182 = smul.addr %s181, 2
      %s183 = scalar_lea.vmem %s2, %s182
      %s184 = smul.u32 16, %s19
      %p185 = scmp.lt.s32.totalorder %s18, 1
      %s186 = scalar_select %p185, %s18, 1
      %p187 = scmp.lt.s32.totalorder %s184, 15
      %s188 = scalar_select %p187, %s184, 15
      %s189 = smul.addr %s186, 16
      %s190 = sadd.s32 %s188, %s189
      %s191 = smul.addr %s190, 8
      %s192 = scalar_lea.vmem %s0, %s191
      %s193 = smul.u32 16, %s19
      %p194 = scmp.lt.s32.totalorder %s18, 1
      %s195 = scalar_select %p194, %s18, 1
      %p196 = scmp.lt.s32.totalorder %s20, 0
      %s197 = scalar_select %p196, %s20, 0
      %s198 = sadd.s32 %s197, %s195
      %s199 = smul.addr %s198, 8
      %s200 = scalar_lea.vmem %s1, %s199
      %p201 = scmp.lt.s32.totalorder %s18, 1
      %s202 = scalar_select %p201, %s18, 1
      %s203 = smul.addr %s202, 2
      %s204 = scalar_lea.vmem %s2, %s203
      %p205 = scmp.eq.s32.totalorder %s19, 0
      %p206 = scmp.eq.s32.totalorder %s20, 0
      %p207 = pnand %p205, %p206
      %p208 = pneg %p207
      // Predicated region
      $region29: #{chamfer_loss.1} parent=27 // pred_check
        _
      $region30: #{chamfer_loss.1} parent=27 // pred_check_branch
        %210 = sbr.rel (%p207) target = $region32
      $region31: #{chamfer_loss.1} parent=27 // pred_region
        %211 = vst [vmem:[%s204] sm:$0x3] 0.0
      $region32: #{chamfer_loss.1} parent=27 // pred_fallthru
        _
      // Predicated region
      $region33: #{chamfer_loss.1} parent=27 // pred_check
        %p212 = pneg %p206
      $region34: #{chamfer_loss.1} parent=27 // pred_check_branch
        %214 = sbr.rel (%p212) target = $region36
      $region35: #{chamfer_loss.1} parent=27 // pred_region
        %215 = vst [vmem:[#allocation2] sm:$0xff] 3e+38
        %216 = vst [vmem:[#allocation2 + $0x8] sm:$0xff] 3e+38
        %217 = vst [vmem:[#allocation2 + $0x10] sm:$0xff] 3e+38
        %218 = vst [vmem:[#allocation2 + $0x18] sm:$0xff] 3e+38
        %219 = vst [vmem:[#allocation2 + $0x20] sm:$0xff] 3e+38
        %220 = vst [vmem:[#allocation2 + $0x28] sm:$0xff] 3e+38
        %221 = vst [vmem:[#allocation2 + $0x30] sm:$0xff] 3e+38
        %222 = vst [vmem:[#allocation2 + $0x38] sm:$0xff] 3e+38
        %223 = vst [vmem:[#allocation2 + $0x40] sm:$0xff] 3e+38
        %224 = vst [vmem:[#allocation2 + $0x48] sm:$0xff] 3e+38
        %225 = vst [vmem:[#allocation2 + $0x50] sm:$0xff] 3e+38
        %226 = vst [vmem:[#allocation2 + $0x58] sm:$0xff] 3e+38
        %227 = vst [vmem:[#allocation2 + $0x60] sm:$0xff] 3e+38
        %228 = vst [vmem:[#allocation2 + $0x68] sm:$0xff] 3e+38
        %229 = vst [vmem:[#allocation2 + $0x70] sm:$0xff] 3e+38
        %230 = vst [vmem:[#allocation2 + $0x78] sm:$0xff] 3e+38
      $region36: #{chamfer_loss.1} parent=27 // pred_fallthru
        _
      // Predicated region
      $region37: #{chamfer_loss.1} parent=27 // pred_check
        %p231 = pneg %p205
      $region38: #{chamfer_loss.1} parent=27 // pred_check_branch
        %233 = sbr.rel (%p231) target = $region40
      $region39: #{chamfer_loss.1} parent=27 // pred_region
        %s234 = scalar_lea.vmem [#allocation3], %s20
        %235 = vst [vmem:[%s234] sm:$0x1] 3e+38
      $region40: #{chamfer_loss.1} parent=27 // pred_fallthru
        _
      %v236 = vld [vmem:[%s192] sm:$0xff]
      %v237 = vld [vmem:[%s192 + $0x8] sm:$0xff]
      %v238 = vld [vmem:[%s192 + $0x10] sm:$0xff]
      %v239 = vld [vmem:[%s192 + $0x18] sm:$0xff]
      %v240 = vld [vmem:[%s192 + $0x20] sm:$0xff]
      %v241 = vld [vmem:[%s192 + $0x28] sm:$0xff]
      %v242 = vld [vmem:[%s192 + $0x30] sm:$0xff]
      %v243 = vld [vmem:[%s192 + $0x38] sm:$0xff]
      %v244 = vld [vmem:[%s192 + $0x40] sm:$0xff]
      %v245 = vld [vmem:[%s192 + $0x48] sm:$0xff]
      %v246 = vld [vmem:[%s192 + $0x50] sm:$0xff]
      %v247 = vld [vmem:[%s192 + $0x58] sm:$0xff]
      %v248 = vld [vmem:[%s192 + $0x60] sm:$0xff]
      %v249 = vld [vmem:[%s192 + $0x68] sm:$0xff]
      %v250 = vld [vmem:[%s192 + $0x70] sm:$0xff]
      %v251 = vld [vmem:[%s192 + $0x78] sm:$0xff]
      %v252 = vld [vmem:[%s200] sm:$0xff]
      %vm253 = vcmask 64512
      %v255 = vsel %vm253, %v236, 0
      %v258 = vsel %vm253, %v237, 0
      %v261 = vsel %vm253, %v238, 0
      %v264 = vsel %vm253, %v239, 0
      %v267 = vsel %vm253, %v240, 0
      %v270 = vsel %vm253, %v241, 0
      %v273 = vsel %vm253, %v242, 0
      %v276 = vsel %vm253, %v243, 0
      %v279 = vsel %vm253, %v244, 0
      %v282 = vsel %vm253, %v245, 0
      %v285 = vsel %vm253, %v246, 0
      %v288 = vsel %vm253, %v247, 0
      %v291 = vsel %vm253, %v248, 0
      %v294 = vsel %vm253, %v249, 0
      %v297 = vsel %vm253, %v250, 0
      %v300 = vsel %vm253, %v251, 0
      %302 = vmatprep.subr.mxu0 0.0
      %v303 = vand.u32 %v252, 4294901760
      %304 = vmatpush1.msra.mxu0 %v303
      %305 = vmatprep.subr.mxu0 0.0
      %306 = vmatpush1.msra.mxu0 0.0
      %307 = vmatprep.subr.mxu0 0.0
      %308 = vmatpush1.msra.mxu0 0.0
      %309 = vmatprep.subr.mxu0 0.0
      %310 = vmatpush1.msra.mxu0 0.0
      %311 = vmatprep.subr.mxu0 0.0
      %312 = vmatpush1.msra.mxu0 0.0
      %313 = vmatprep.subr.mxu0 0.0
      %314 = vmatpush1.msra.mxu0 0.0
      %315 = vmatprep.subr.mxu0 0.0
      %316 = vmatpush1.msra.mxu0 0.0
      %317 = vmatprep.subr.mxu0 0.0
      %318 = vmatpush1.msra.mxu0 0.0
      %319 = vmatprep.subr.mxu0 0.0
      %320 = vmatpush1.msra.mxu0 0.0
      %321 = vmatprep.subr.mxu0 0.0
      %322 = vmatpush1.msra.mxu0 0.0
      %323 = vmatprep.subr.mxu0 0.0
      %324 = vmatpush1.msra.mxu0 0.0
      %325 = vmatprep.subr.mxu0 0.0
      %326 = vmatpush1.msra.mxu0 0.0
      %327 = vmatprep.subr.mxu0 0.0
      %328 = vmatpush1.msra.mxu0 0.0
      %329 = vmatprep.subr.mxu0 0.0
      %330 = vmatpush1.msra.mxu0 0.0
      %331 = vmatprep.subr.mxu0 0.0
      %332 = vmatpush1.msra.mxu0 0.0
      %333 = vmatprep.subr.mxu0 0.0
      %334 = vmatpush1.msra.mxu0 0.0
      %335 = vmatprep.subr.mxu0 0.0
      %336 = vmatpush1.msra.mxu0 0.0
      %337 = vmatprep.subr.mxu0 0.0
      %338 = vmatpush1.msra.mxu0 0.0
      %339 = vmatprep.subr.mxu0 0.0
      %340 = vmatpush1.msra.mxu0 0.0
      %341 = vmatprep.subr.mxu0 0.0
      %342 = vmatpush1.msra.mxu0 0.0
      %343 = vmatprep.subr.mxu0 0.0
      %344 = vmatpush1.msra.mxu0 0.0
      %345 = vmatprep.subr.mxu0 0.0
      %346 = vmatpush1.msra.mxu0 0.0
      %347 = vmatprep.subr.mxu0 0.0
      %348 = vmatpush1.msra.mxu0 0.0
      %349 = vmatprep.subr.mxu0 0.0
      %350 = vmatpush1.msra.mxu0 0.0
      %351 = vmatprep.subr.mxu0 0.0
      %352 = vmatpush1.msra.mxu0 0.0
      %353 = vmatprep.subr.mxu0 0.0
      %354 = vmatpush1.msra.mxu0 0.0
      %355 = vmatprep.subr.mxu0 0.0
      %356 = vmatpush1.msra.mxu0 0.0
      %357 = vmatprep.subr.mxu0 0.0
      %358 = vmatpush1.msra.mxu0 0.0
      %359 = vmatprep.subr.mxu0 0.0
      %360 = vmatpush1.msra.mxu0 0.0
      %361 = vmatprep.subr.mxu0 0.0
      %362 = vmatpush1.msra.mxu0 0.0
      %363 = vmatprep.subr.mxu0 0.0
      %364 = vmatpush1.msra.mxu0 0.0
      %365 = vmatprep.subr.mxu0 0.0
      %366 = vmatpush1.msra.mxu0 0.0
      %367 = vmatprep.mubr.f32.mxu0 0.0
      %v368 = vand.u32 %v255, 4294901760
      %v369 = vsub.f32 %v255, %v368
      %v370 = vand.u32 %v369, 4294901760
      %v371 = vsub.f32 %v369, %v370
      %v372 = vand.u32 %v371, 4294901760
      %373 = vmatmul.mubr.f32.gmra.mrb[0].mxu0 %v372
      %v374 = vpop.f32.mrb[0].mxu0
      %v375 = vadd.f32 0.0, %v374
      %v376 = vpop.f32.mrb[0].mxu0
      %377 = vmatprep.mubr.f32.mxu0 0.0
      %v378 = vand.u32 %v258, 4294901760
      %v379 = vsub.f32 %v258, %v378
      %v380 = vand.u32 %v379, 4294901760
      %v381 = vsub.f32 %v379, %v380
      %v382 = vand.u32 %v381, 4294901760
      %383 = vmatmul.mubr.f32.gmra.mrb[0].mxu0 %v382
      %v384 = vpop.f32.mrb[0].mxu0
      %v385 = vadd.f32 0.0, %v384
      %v386 = vpop.f32.mrb[0].mxu0
      %387 = vmatprep.mubr.f32.mxu0 0.0
      %v388 = vand.u32 %v261, 4294901760
      %v389 = vsub.f32 %v261, %v388
      %v390 = vand.u32 %v389, 4294901760
      %v391 = vsub.f32 %v389, %v390
      %v392 = vand.u32 %v391, 4294901760
      %393 = vmatmul.mubr.f32.gmra.mrb[0].mxu0 %v392
      %v394 = vpop.f32.mrb[0].mxu0
      %v395 = vadd.f32 0.0, %v394
      %v396 = vpop.f32.mrb[0].mxu0
      %397 = vmatprep.mubr.f32.mxu0 0.0
      %v398 = vand.u32 %v264, 4294901760
      %v399 = vsub.f32 %v264, %v398
      %v400 = vand.u32 %v399, 4294901760
      %v401 = vsub.f32 %v399, %v400
      %v402 = vand.u32 %v401, 4294901760
      %403 = vmatmul.mubr.f32.gmra.mrb[0].mxu0 %v402
      %v404 = vpop.f32.mrb[0].mxu0
      %v405 = vadd.f32 0.0, %v404
      %v406 = vpop.f32.mrb[0].mxu0
      %407 = vmatprep.mubr.f32.mxu0 0.0
      %v408 = vand.u32 %v267, 4294901760
      %v409 = vsub.f32 %v267, %v408
      %v410 = vand.u32 %v409, 4294901760
      %v411 = vsub.f32 %v409, %v410
      %v412 = vand.u32 %v411, 4294901760
      %413 = vmatmul.mubr.f32.gmra.mrb[0].mxu0 %v412
      %v414 = vpop.f32.mrb[0].mxu0
      %v415 = vadd.f32 0.0, %v414
      %v416 = vpop.f32.mrb[0].mxu0
      %417 = vmatprep.mubr.f32.mxu0 0.0
      %v418 = vand.u32 %v270, 4294901760
      %v419 = vsub.f32 %v270, %v418
      %v420 = vand.u32 %v419, 4294901760
      %v421 = vsub.f32 %v419, %v420
      %v422 = vand.u32 %v421, 4294901760
      %423 = vmatmul.mubr.f32.gmra.mrb[0].mxu0 %v422
      %v424 = vpop.f32.mrb[0].mxu0
      %v425 = vadd.f32 0.0, %v424
      %v426 = vpop.f32.mrb[0].mxu0
      %427 = vmatprep.mubr.f32.mxu0 0.0
      %v428 = vand.u32 %v273, 4294901760
      %v429 = vsub.f32 %v273, %v428
      %v430 = vand.u32 %v429, 4294901760
      %v431 = vsub.f32 %v429, %v430
      %v432 = vand.u32 %v431, 4294901760
      %433 = vmatmul.mubr.f32.gmra.mrb[0].mxu0 %v432
      %v434 = vpop.f32.mrb[0].mxu0
      %v435 = vadd.f32 0.0, %v434
      %v436 = vpop.f32.mrb[0].mxu0
      %437 = vmatprep.mubr.f32.mxu0 0.0
      %v438 = vand.u32 %v276, 4294901760
      %v439 = vsub.f32 %v276, %v438
      %v440 = vand.u32 %v439, 4294901760
      %v441 = vsub.f32 %v439, %v440
      %v442 = vand.u32 %v441, 4294901760
      %443 = vmatmul.mubr.f32.gmra.mrb[0].mxu0 %v442
      %v444 = vpop.f32.mrb[0].mxu0
      %v445 = vadd.f32 0.0, %v444
      %v446 = vpop.f32.mrb[0].mxu0
      %447 = vmatprep.mubr.f32.mxu0 0.0
      %v448 = vand.u32 %v279, 4294901760
      %v449 = vsub.f32 %v279, %v448
      %v450 = vand.u32 %v449, 4294901760
      %v451 = vsub.f32 %v449, %v450
      %v452 = vand.u32 %v451, 4294901760
      %453 = vmatmul.mubr.f32.gmra.mrb[0].mxu0 %v452
      %v454 = vpop.f32.mrb[0].mxu0
      %v455 = vadd.f32 0.0, %v454
      %v456 = vpop.f32.mrb[0].mxu0
      %457 = vmatprep.mubr.f32.mxu0 0.0
      %v458 = vand.u32 %v282, 4294901760
      %v459 = vsub.f32 %v282, %v458
      %v460 = vand.u32 %v459, 4294901760
      %v461 = vsub.f32 %v459, %v460
      %v462 = vand.u32 %v461, 4294901760
      %463 = vmatmul.mubr.f32.gmra.mrb[0].mxu0 %v462
      %v464 = vpop.f32.mrb[0].mxu0
      %v465 = vadd.f32 0.0, %v464
      %v466 = vpop.f32.mrb[0].mxu0
      %467 = vmatprep.mubr.f32.mxu0 0.0
      %v468 = vand.u32 %v285, 4294901760
      %v469 = vsub.f32 %v285, %v468
      %v470 = vand.u32 %v469, 4294901760
      %v471 = vsub.f32 %v469, %v470
      %v472 = vand.u32 %v471, 4294901760
      %473 = vmatmul.mubr.f32.gmra.mrb[0].mxu0 %v472
      %v474 = vpop.f32.mrb[0].mxu0
      %v475 = vadd.f32 0.0, %v474
      %v476 = vpop.f32.mrb[0].mxu0
      %477 = vmatprep.mubr.f32.mxu0 0.0
      %v478 = vand.u32 %v288, 4294901760
      %v479 = vsub.f32 %v288, %v478
      %v480 = vand.u32 %v479, 4294901760
      %v481 = vsub.f32 %v479, %v480
      %v482 = vand.u32 %v481, 4294901760
      %483 = vmatmul.mubr.f32.gmra.mrb[0].mxu0 %v482
      %v484 = vpop.f32.mrb[0].mxu0
      %v485 = vadd.f32 0.0, %v484
      %v486 = vpop.f32.mrb[0].mxu0
      %487 = vmatprep.mubr.f32.mxu0 0.0
      %v488 = vand.u32 %v291, 4294901760
      %v489 = vsub.f32 %v291, %v488
      %v490 = vand.u32 %v489, 4294901760
      %v491 = vsub.f32 %v489, %v490
      %v492 = vand.u32 %v491, 4294901760
      %493 = vmatmul.mubr.f32.gmra.mrb[0].mxu0 %v492
      %v494 = vpop.f32.mrb[0].mxu0
      %v495 = vadd.f32 0.0, %v494
      %v496 = vpop.f32.mrb[0].mxu0
      %497 = vmatprep.mubr.f32.mxu0 0.0
      %v498 = vand.u32 %v294, 4294901760
      %v499 = vsub.f32 %v294, %v498
      %v500 = vand.u32 %v499, 4294901760
      %v501 = vsub.f32 %v499, %v500
      %v502 = vand.u32 %v501, 4294901760
      %503 = vmatmul.mubr.f32.gmra.mrb[0].mxu0 %v502
      %v504 = vpop.f32.mrb[0].mxu0
      %v505 = vadd.f32 0.0, %v504
      %v506 = vpop.f32.mrb[0].mxu0
      %507 = vmatprep.mubr.f32.mxu0 0.0
      %v508 = vand.u32 %v297, 4294901760
      %v509 = vsub.f32 %v297, %v508
      %v510 = vand.u32 %v509, 4294901760
      %v511 = vsub.f32 %v509, %v510
      %v512 = vand.u32 %v511, 4294901760
      %513 = vmatmul.mubr.f32.gmra.mrb[0].mxu0 %v512
      %v514 = vpop.f32.mrb[0].mxu0
      %v515 = vadd.f32 0.0, %v514
      %v516 = vpop.f32.mrb[0].mxu0
      %517 = vmatprep.mubr.f32.mxu0 0.0
      %v518 = vand.u32 %v300, 4294901760
      %v519 = vsub.f32 %v300, %v518
      %v520 = vand.u32 %v519, 4294901760
      %v521 = vsub.f32 %v519, %v520
      %v522 = vand.u32 %v521, 4294901760
      %523 = vmatmul.mubr.f32.gmra.mrb[0].mxu0 %v522
      %v524 = vpop.f32.mrb[0].mxu0
      %v525 = vadd.f32 0.0, %v524
      %v526 = vpop.f32.mrb[0].mxu0
      %527 = vdwg.mxu0
      %528 = vmatprep.subr.mxu0 0.0
      %v529 = vand.u32 %v252, 4294901760
      %v530 = vsub.f32 %v252, %v529
      %v531 = vand.u32 %v530, 4294901760
      %v532 = vsub.f32 %v530, %v531
      %v533 = vand.u32 %v532, 4294901760
      %534 = vmatpush1.msra.mxu0 %v533
      %535 = vmatprep.subr.mxu0 0.0
      %536 = vmatpush1.msra.mxu0 0.0
      %537 = vmatprep.subr.mxu0 0.0
      %538 = vmatpush1.msra.mxu0 0.0
      %539 = vmatprep.subr.mxu0 0.0
      %540 = vmatpush1.msra.mxu0 0.0
      %541 = vmatprep.subr.mxu0 0.0
      %542 = vmatpush1.msra.mxu0 0.0
      %543 = vmatprep.subr.mxu0 0.0
      %544 = vmatpush1.msra.mxu0 0.0
      %545 = vmatprep.subr.mxu0 0.0
      %546 = vmatpush1.msra.mxu0 0.0
      %547 = vmatprep.subr.mxu0 0.0
      %548 = vmatpush1.msra.mxu0 0.0
      %549 = vmatprep.subr.mxu0 0.0
      %550 = vmatpush1.msra.mxu0 0.0
      %551 = vmatprep.subr.mxu0 0.0
      %552 = vmatpush1.msra.mxu0 0.0
      %553 = vmatprep.subr.mxu0 0.0
      %554 = vmatpush1.msra.mxu0 0.0
      %555 = vmatprep.subr.mxu0 0.0
      %556 = vmatpush1.msra.mxu0 0.0
      %557 = vmatprep.subr.mxu0 0.0
      %558 = vmatpush1.msra.mxu0 0.0
      %559 = vmatprep.subr.mxu0 0.0
      %560 = vmatpush1.msra.mxu0 0.0
      %561 = vmatprep.subr.mxu0 0.0
      %562 = vmatpush1.msra.mxu0 0.0
      %563 = vmatprep.subr.mxu0 0.0
      %564 = vmatpush1.msra.mxu0 0.0
      %565 = vmatprep.subr.mxu0 0.0
      %566 = vmatpush1.msra.mxu0 0.0
      %567 = vmatprep.subr.mxu0 0.0
      %568 = vmatpush1.msra.mxu0 0.0
      %569 = vmatprep.subr.mxu0 0.0
      %570 = vmatpush1.msra.mxu0 0.0
      %571 = vmatprep.subr.mxu0 0.0
      %572 = vmatpush1.msra.mxu0 0.0
      %573 = vmatprep.subr.mxu0 0.0
      %574 = vmatpush1.msra.mxu0 0.0
      %575 = vmatprep.subr.mxu0 0.0
      %576 = vmatpush1.msra.mxu0 0.0
      %577 = vmatprep.subr.mxu0 0.0
      %578 = vmatpush1.msra.mxu0 0.0
      %579 = vmatprep.subr.mxu0 0.0
      %580 = vmatpush1.msra.mxu0 0.0
      %581 = vmatprep.subr.mxu0 0.0
      %582 = vmatpush1.msra.mxu0 0.0
      %583 = vmatprep.subr.mxu0 0.0
      %584 = vmatpush1.msra.mxu0 0.0
      %585 = vmatprep.subr.mxu0 0.0
      %586 = vmatpush1.msra.mxu0 0.0
      %587 = vmatprep.subr.mxu0 0.0
      %588 = vmatpush1.msra.mxu0 0.0
      %589 = vmatprep.subr.mxu0 0.0
      %590 = vmatpush1.msra.mxu0 0.0
      %591 = vmatprep.subr.mxu0 0.0
      %592 = vmatpush1.msra.mxu0 0.0
      %593 = vmatprep.subr.mxu0 0.0
      %594 = vmatpush1.msra.mxu0 0.0
      %595 = vmatprep.subr.mxu0 0.0
      %596 = vmatpush1.msra.mxu0 0.0
      %597 = vmatprep.mubr.f32.mxu0 0.0
      %v598 = vand.u32 %v255, 4294901760
      %599 = vmatmul.mubr.f32.gmra.mrb[0].mxu0 %v598
      %v600 = vpop.f32.mrb[0].mxu0
      %v601 = vadd.f32 %v375, %v600
      %v602 = vpop.f32.mrb[0].mxu0
      %603 = vmatprep.mubr.f32.mxu0 0.0
      %v604 = vand.u32 %v258, 4294901760
      %605 = vmatmul.mubr.f32.gmra.mrb[0].mxu0 %v604
      %v606 = vpop.f32.mrb[0].mxu0
      %v607 = vadd.f32 %v385, %v606
      %v608 = vpop.f32.mrb[0].mxu0
      %609 = vmatprep.mubr.f32.mxu0 0.0
      %v610 = vand.u32 %v261, 4294901760
      %611 = vmatmul.mubr.f32.gmra.mrb[0].mxu0 %v610
      %v612 = vpop.f32.mrb[0].mxu0
      %v613 = vadd.f32 %v395, %v612
      %v614 = vpop.f32.mrb[0].mxu0
      %615 = vmatprep.mubr.f32.mxu0 0.0
      %v616 = vand.u32 %v264, 4294901760
      %617 = vmatmul.mubr.f32.gmra.mrb[0].mxu0 %v616
      %v618 = vpop.f32.mrb[0].mxu0
      %v619 = vadd.f32 %v405, %v618
      %v620 = vpop.f32.mrb[0].mxu0
      %621 = vmatprep.mubr.f32.mxu0 0.0
      %v622 = vand.u32 %v267, 4294901760
      %623 = vmatmul.mubr.f32.gmra.mrb[0].mxu0 %v622
      %v624 = vpop.f32.mrb[0].mxu0
      %v625 = vadd.f32 %v415, %v624
      %v626 = vpop.f32.mrb[0].mxu0
      %627 = vmatprep.mubr.f32.mxu0 0.0
      %v628 = vand.u32 %v270, 4294901760
      %629 = vmatmul.mubr.f32.gmra.mrb[0].mxu0 %v628
      %v630 = vpop.f32.mrb[0].mxu0
      %v631 = vadd.f32 %v425, %v630
      %v632 = vpop.f32.mrb[0].mxu0
      %633 = vmatprep.mubr.f32.mxu0 0.0
      %v634 = vand.u32 %v273, 4294901760
      %635 = vmatmul.mubr.f32.gmra.mrb[0].mxu0 %v634
      %v636 = vpop.f32.mrb[0].mxu0
      %v637 = vadd.f32 %v435, %v636
      %v638 = vpop.f32.mrb[0].mxu0
      %639 = vmatprep.mubr.f32.mxu0 0.0
      %v640 = vand.u32 %v276, 4294901760
      %641 = vmatmul.mubr.f32.gmra.mrb[0].mxu0 %v640
      %v642 = vpop.f32.mrb[0].mxu0
      %v643 = vadd.f32 %v445, %v642
      %v644 = vpop.f32.mrb[0].mxu0
      %645 = vmatprep.mubr.f32.mxu0 0.0
      %v646 = vand.u32 %v279, 4294901760
      %647 = vmatmul.mubr.f32.gmra.mrb[0].mxu0 %v646
      %v648 = vpop.f32.mrb[0].mxu0
      %v649 = vadd.f32 %v455, %v648
      %v650 = vpop.f32.mrb[0].mxu0
      %651 = vmatprep.mubr.f32.mxu0 0.0
      %v652 = vand.u32 %v282, 4294901760
      %653 = vmatmul.mubr.f32.gmra.mrb[0].mxu0 %v652
      %v654 = vpop.f32.mrb[0].mxu0
      %v655 = vadd.f32 %v465, %v654
      %v656 = vpop.f32.mrb[0].mxu0
      %657 = vmatprep.mubr.f32.mxu0 0.0
      %v658 = vand.u32 %v285, 4294901760
      %659 = vmatmul.mubr.f32.gmra.mrb[0].mxu0 %v658
      %v660 = vpop.f32.mrb[0].mxu0
      %v661 = vadd.f32 %v475, %v660
      %v662 = vpop.f32.mrb[0].mxu0
      %663 = vmatprep.mubr.f32.mxu0 0.0
      %v664 = vand.u32 %v288, 4294901760
      %665 = vmatmul.mubr.f32.gmra.mrb[0].mxu0 %v664
      %v666 = vpop.f32.mrb[0].mxu0
      %v667 = vadd.f32 %v485, %v666
      %v668 = vpop.f32.mrb[0].mxu0
      %669 = vmatprep.mubr.f32.mxu0 0.0
      %v670 = vand.u32 %v291, 4294901760
      %671 = vmatmul.mubr.f32.gmra.mrb[0].mxu0 %v670
      %v672 = vpop.f32.mrb[0].mxu0
      %v673 = vadd.f32 %v495, %v672
      %v674 = vpop.f32.mrb[0].mxu0
      %675 = vmatprep.mubr.f32.mxu0 0.0
      %v676 = vand.u32 %v294, 4294901760
      %677 = vmatmul.mubr.f32.gmra.mrb[0].mxu0 %v676
      %v678 = vpop.f32.mrb[0].mxu0
      %v679 = vadd.f32 %v505, %v678
      %v680 = vpop.f32.mrb[0].mxu0
      %681 = vmatprep.mubr.f32.mxu0 0.0
      %v682 = vand.u32 %v297, 4294901760
      %683 = vmatmul.mubr.f32.gmra.mrb[0].mxu0 %v682
      %v684 = vpop.f32.mrb[0].mxu0
      %v685 = vadd.f32 %v515, %v684
      %v686 = vpop.f32.mrb[0].mxu0
      %687 = vmatprep.mubr.f32.mxu0 0.0
      %v688 = vand.u32 %v300, 4294901760
      %689 = vmatmul.mubr.f32.gmra.mrb[0].mxu0 %v688
      %v690 = vpop.f32.mrb[0].mxu0
      %v691 = vadd.f32 %v525, %v690
      %v692 = vpop.f32.mrb[0].mxu0
      %693 = vdwg.mxu0
      %694 = vmatprep.subr.mxu0 0.0
      %v695 = vand.u32 %v252, 4294901760
      %v696 = vsub.f32 %v252, %v695
      %697 = vmatpush1.msra.mxu0 %v696
      %698 = vmatprep.subr.mxu0 0.0
      %699 = vmatpush1.msra.mxu0 0.0
      %700 = vmatprep.subr.mxu0 0.0
      %701 = vmatpush1.msra.mxu0 0.0
      %702 = vmatprep.subr.mxu0 0.0
      %703 = vmatpush1.msra.mxu0 0.0
      %704 = vmatprep.subr.mxu0 0.0
      %705 = vmatpush1.msra.mxu0 0.0
      %706 = vmatprep.subr.mxu0 0.0
      %707 = vmatpush1.msra.mxu0 0.0
      %708 = vmatprep.subr.mxu0 0.0
      %709 = vmatpush1.msra.mxu0 0.0
      %710 = vmatprep.subr.mxu0 0.0
      %711 = vmatpush1.msra.mxu0 0.0
      %712 = vmatprep.subr.mxu0 0.0
      %713 = vmatpush1.msra.mxu0 0.0
      %714 = vmatprep.subr.mxu0 0.0
      %715 = vmatpush1.msra.mxu0 0.0
      %716 = vmatprep.subr.mxu0 0.0
      %717 = vmatpush1.msra.mxu0 0.0
      %718 = vmatprep.subr.mxu0 0.0
      %719 = vmatpush1.msra.mxu0 0.0
      %720 = vmatprep.subr.mxu0 0.0
      %721 = vmatpush1.msra.mxu0 0.0
      %722 = vmatprep.subr.mxu0 0.0
      %723 = vmatpush1.msra.mxu0 0.0
      %724 = vmatprep.subr.mxu0 0.0
      %725 = vmatpush1.msra.mxu0 0.0
      %726 = vmatprep.subr.mxu0 0.0
      %727 = vmatpush1.msra.mxu0 0.0
      %728 = vmatprep.subr.mxu0 0.0
      %729 = vmatpush1.msra.mxu0 0.0
      %730 = vmatprep.subr.mxu0 0.0
      %731 = vmatpush1.msra.mxu0 0.0
      %732 = vmatprep.subr.mxu0 0.0
      %733 = vmatpush1.msra.mxu0 0.0
      %734 = vmatprep.subr.mxu0 0.0
      %735 = vmatpush1.msra.mxu0 0.0
      %736 = vmatprep.subr.mxu0 0.0
      %737 = vmatpush1.msra.mxu0 0.0
      %738 = vmatprep.subr.mxu0 0.0
      %739 = vmatpush1.msra.mxu0 0.0
      %740 = vmatprep.subr.mxu0 0.0
      %741 = vmatpush1.msra.mxu0 0.0
      %742 = vmatprep.subr.mxu0 0.0
      %743 = vmatpush1.msra.mxu0 0.0
      %744 = vmatprep.subr.mxu0 0.0
      %745 = vmatpush1.msra.mxu0 0.0
      %746 = vmatprep.subr.mxu0 0.0
      %747 = vmatpush1.msra.mxu0 0.0
      %748 = vmatprep.subr.mxu0 0.0
      %749 = vmatpush1.msra.mxu0 0.0
      %750 = vmatprep.subr.mxu0 0.0
      %751 = vmatpush1.msra.mxu0 0.0
      %752 = vmatprep.subr.mxu0 0.0
      %753 = vmatpush1.msra.mxu0 0.0
      %754 = vmatprep.subr.mxu0 0.0
      %755 = vmatpush1.msra.mxu0 0.0
      %756 = vmatprep.subr.mxu0 0.0
      %757 = vmatpush1.msra.mxu0 0.0
      %758 = vmatprep.subr.mxu0 0.0
      %759 = vmatpush1.msra.mxu0 0.0
      %760 = vmatprep.mubr.f32.mxu0 0.0
      %v761 = vand.u32 %v255, 4294901760
      %v762 = vsub.f32 %v255, %v761
      %763 = vmatmul.mubr.f32.gmra.mrb[0].mxu0 %v762
      %v764 = vpop.f32.mrb[0].mxu0
      %v765 = vadd.f32 %v601, %v764
      %v766 = vpop.f32.mrb[0].mxu0
      %767 = vmatprep.mubr.f32.mxu0 0.0
      %v768 = vand.u32 %v258, 4294901760
      %v769 = vsub.f32 %v258, %v768
      %770 = vmatmul.mubr.f32.gmra.mrb[0].mxu0 %v769
      %v771 = vpop.f32.mrb[0].mxu0
      %v772 = vadd.f32 %v607, %v771
      %v773 = vpop.f32.mrb[0].mxu0
      %774 = vmatprep.mubr.f32.mxu0 0.0
      %v775 = vand.u32 %v261, 4294901760
      %v776 = vsub.f32 %v261, %v775
      %777 = vmatmul.mubr.f32.gmra.mrb[0].mxu0 %v776
      %v778 = vpop.f32.mrb[0].mxu0
      %v779 = vadd.f32 %v613, %v778
      %v780 = vpop.f32.mrb[0].mxu0
      %781 = vmatprep.mubr.f32.mxu0 0.0
      %v782 = vand.u32 %v264, 4294901760
      %v783 = vsub.f32 %v264, %v782
      %784 = vmatmul.mubr.f32.gmra.mrb[0].mxu0 %v783
      %v785 = vpop.f32.mrb[0].mxu0
      %v786 = vadd.f32 %v619, %v785
      %v787 = vpop.f32.mrb[0].mxu0
      %788 = vmatprep.mubr.f32.mxu0 0.0
      %v789 = vand.u32 %v267, 4294901760
      %v790 = vsub.f32 %v267, %v789
      %791 = vmatmul.mubr.f32.gmra.mrb[0].mxu0 %v790
      %v792 = vpop.f32.mrb[0].mxu0
      %v793 = vadd.f32 %v625, %v792
      %v794 = vpop.f32.mrb[0].mxu0
      %795 = vmatprep.mubr.f32.mxu0 0.0
      %v796 = vand.u32 %v270, 4294901760
      %v797 = vsub.f32 %v270, %v796
      %798 = vmatmul.mubr.f32.gmra.mrb[0].mxu0 %v797
      %v799 = vpop.f32.mrb[0].mxu0
      %v800 = vadd.f32 %v631, %v799
      %v801 = vpop.f32.mrb[0].mxu0
      %802 = vmatprep.mubr.f32.mxu0 0.0
      %v803 = vand.u32 %v273, 4294901760
      %v804 = vsub.f32 %v273, %v803
      %805 = vmatmul.mubr.f32.gmra.mrb[0].mxu0 %v804
      %v806 = vpop.f32.mrb[0].mxu0
      %v807 = vadd.f32 %v637, %v806
      %v808 = vpop.f32.mrb[0].mxu0
      %809 = vmatprep.mubr.f32.mxu0 0.0
      %v810 = vand.u32 %v276, 4294901760
      %v811 = vsub.f32 %v276, %v810
      %812 = vmatmul.mubr.f32.gmra.mrb[0].mxu0 %v811
      %v813 = vpop.f32.mrb[0].mxu0
      %v814 = vadd.f32 %v643, %v813
      %v815 = vpop.f32.mrb[0].mxu0
      %816 = vmatprep.mubr.f32.mxu0 0.0
      %v817 = vand.u32 %v279, 4294901760
      %v818 = vsub.f32 %v279, %v817
      %819 = vmatmul.mubr.f32.gmra.mrb[0].mxu0 %v818
      %v820 = vpop.f32.mrb[0].mxu0
      %v821 = vadd.f32 %v649, %v820
      %v822 = vpop.f32.mrb[0].mxu0
      %823 = vmatprep.mubr.f32.mxu0 0.0
      %v824 = vand.u32 %v282, 4294901760
      %v825 = vsub.f32 %v282, %v824
      %826 = vmatmul.mubr.f32.gmra.mrb[0].mxu0 %v825
      %v827 = vpop.f32.mrb[0].mxu0
      %v828 = vadd.f32 %v655, %v827
      %v829 = vpop.f32.mrb[0].mxu0
      %830 = vmatprep.mubr.f32.mxu0 0.0
      %v831 = vand.u32 %v285, 4294901760
      %v832 = vsub.f32 %v285, %v831
      %833 = vmatmul.mubr.f32.gmra.mrb[0].mxu0 %v832
      %v834 = vpop.f32.mrb[0].mxu0
      %v835 = vadd.f32 %v661, %v834
      %v836 = vpop.f32.mrb[0].mxu0
      %837 = vmatprep.mubr.f32.mxu0 0.0
      %v838 = vand.u32 %v288, 4294901760
      %v839 = vsub.f32 %v288, %v838
      %840 = vmatmul.mubr.f32.gmra.mrb[0].mxu0 %v839
      %v841 = vpop.f32.mrb[0].mxu0
      %v842 = vadd.f32 %v667, %v841
      %v843 = vpop.f32.mrb[0].mxu0
      %844 = vmatprep.mubr.f32.mxu0 0.0
      %v845 = vand.u32 %v291, 4294901760
      %v846 = vsub.f32 %v291, %v845
      %847 = vmatmul.mubr.f32.gmra.mrb[0].mxu0 %v846
      %v848 = vpop.f32.mrb[0].mxu0
      %v849 = vadd.f32 %v673, %v848
      %v850 = vpop.f32.mrb[0].mxu0
      %851 = vmatprep.mubr.f32.mxu0 0.0
      %v852 = vand.u32 %v294, 4294901760
      %v853 = vsub.f32 %v294, %v852
      %854 = vmatmul.mubr.f32.gmra.mrb[0].mxu0 %v853
      %v855 = vpop.f32.mrb[0].mxu0
      %v856 = vadd.f32 %v679, %v855
      %v857 = vpop.f32.mrb[0].mxu0
      %858 = vmatprep.mubr.f32.mxu0 0.0
      %v859 = vand.u32 %v297, 4294901760
      %v860 = vsub.f32 %v297, %v859
      %861 = vmatmul.mubr.f32.gmra.mrb[0].mxu0 %v860
      %v862 = vpop.f32.mrb[0].mxu0
      %v863 = vadd.f32 %v685, %v862
      %v864 = vpop.f32.mrb[0].mxu0
      %865 = vmatprep.mubr.f32.mxu0 0.0
      %v866 = vand.u32 %v300, 4294901760
      %v867 = vsub.f32 %v300, %v866
      %868 = vmatmul.mubr.f32.gmra.mrb[0].mxu0 %v867
      %v869 = vpop.f32.mrb[0].mxu0
      %v870 = vadd.f32 %v691, %v869
      %v871 = vpop.f32.mrb[0].mxu0
      %872 = vdwg.mxu0
      %873 = vmatprep.subr.mxu0 0.0
      %v874 = vand.u32 %v252, 4294901760
      %875 = vmatpush1.msra.mxu0 %v874
      %876 = vmatprep.subr.mxu0 0.0
      %877 = vmatpush1.msra.mxu0 0.0
      %878 = vmatprep.subr.mxu0 0.0
      %879 = vmatpush1.msra.mxu0 0.0
      %880 = vmatprep.subr.mxu0 0.0
      %881 = vmatpush1.msra.mxu0 0.0
      %882 = vmatprep.subr.mxu0 0.0
      %883 = vmatpush1.msra.mxu0 0.0
      %884 = vmatprep.subr.mxu0 0.0
      %885 = vmatpush1.msra.mxu0 0.0
      %886 = vmatprep.subr.mxu0 0.0
      %887 = vmatpush1.msra.mxu0 0.0
      %888 = vmatprep.subr.mxu0 0.0
      %889 = vmatpush1.msra.mxu0 0.0
      %890 = vmatprep.subr.mxu0 0.0
      %891 = vmatpush1.msra.mxu0 0.0
      %892 = vmatprep.subr.mxu0 0.0
      %893 = vmatpush1.msra.mxu0 0.0
      %894 = vmatprep.subr.mxu0 0.0
      %895 = vmatpush1.msra.mxu0 0.0
      %896 = vmatprep.subr.mxu0 0.0
      %897 = vmatpush1.msra.mxu0 0.0
      %898 = vmatprep.subr.mxu0 0.0
      %899 = vmatpush1.msra.mxu0 0.0
      %900 = vmatprep.subr.mxu0 0.0
      %901 = vmatpush1.msra.mxu0 0.0
      %902 = vmatprep.subr.mxu0 0.0
      %903 = vmatpush1.msra.mxu0 0.0
      %904 = vmatprep.subr.mxu0 0.0
      %905 = vmatpush1.msra.mxu0 0.0
      %906 = vmatprep.subr.mxu0 0.0
      %907 = vmatpush1.msra.mxu0 0.0
      %908 = vmatprep.subr.mxu0 0.0
      %909 = vmatpush1.msra.mxu0 0.0
      %910 = vmatprep.subr.mxu0 0.0
      %911 = vmatpush1.msra.mxu0 0.0
      %912 = vmatprep.subr.mxu0 0.0
      %913 = vmatpush1.msra.mxu0 0.0
      %914 = vmatprep.subr.mxu0 0.0
      %915 = vmatpush1.msra.mxu0 0.0
      %916 = vmatprep.subr.mxu0 0.0
      %917 = vmatpush1.msra.mxu0 0.0
      %918 = vmatprep.subr.mxu0 0.0
      %919 = vmatpush1.msra.mxu0 0.0
      %920 = vmatprep.subr.mxu0 0.0
      %921 = vmatpush1.msra.mxu0 0.0
      %922 = vmatprep.subr.mxu0 0.0
      %923 = vmatpush1.msra.mxu0 0.0
      %924 = vmatprep.subr.mxu0 0.0
      %925 = vmatpush1.msra.mxu0 0.0
      %926 = vmatprep.subr.mxu0 0.0
      %927 = vmatpush1.msra.mxu0 0.0
      %928 = vmatprep.subr.mxu0 0.0
      %929 = vmatpush1.msra.mxu0 0.0
      %930 = vmatprep.subr.mxu0 0.0
      %931 = vmatpush1.msra.mxu0 0.0
      %932 = vmatprep.subr.mxu0 0.0
      %933 = vmatpush1.msra.mxu0 0.0
      %934 = vmatprep.subr.mxu0 0.0
      %935 = vmatpush1.msra.mxu0 0.0
      %936 = vmatprep.subr.mxu0 0.0
      %937 = vmatpush1.msra.mxu0 0.0
      %938 = vmatprep.mubr.f32.mxu0 0.0
      %v939 = vand.u32 %v255, 4294901760
      %v940 = vsub.f32 %v255, %v939
      %v941 = vand.u32 %v940, 4294901760
      %942 = vmatmul.mubr.f32.gmra.mrb[0].mxu0 %v941
      %v943 = vpop.f32.mrb[0].mxu0
      %v944 = vadd.f32 %v765, %v943
      %v945 = vpop.f32.mrb[0].mxu0
      %946 = vmatprep.mubr.f32.mxu0 0.0
      %v947 = vand.u32 %v258, 4294901760
      %v948 = vsub.f32 %v258, %v947
      %v949 = vand.u32 %v948, 4294901760
      %950 = vmatmul.mubr.f32.gmra.mrb[0].mxu0 %v949
      %v951 = vpop.f32.mrb[0].mxu0
      %v952 = vadd.f32 %v772, %v951
      %v953 = vpop.f32.mrb[0].mxu0
      %954 = vmatprep.mubr.f32.mxu0 0.0
      %v955 = vand.u32 %v261, 4294901760
      %v956 = vsub.f32 %v261, %v955
      %v957 = vand.u32 %v956, 4294901760
      %958 = vmatmul.mubr.f32.gmra.mrb[0].mxu0 %v957
      %v959 = vpop.f32.mrb[0].mxu0
      %v960 = vadd.f32 %v779, %v959
      %v961 = vpop.f32.mrb[0].mxu0
      %962 = vmatprep.mubr.f32.mxu0 0.0
      %v963 = vand.u32 %v264, 4294901760
      %v964 = vsub.f32 %v264, %v963
      %v965 = vand.u32 %v964, 4294901760
      %966 = vmatmul.mubr.f32.gmra.mrb[0].mxu0 %v965
      %v967 = vpop.f32.mrb[0].mxu0
      %v968 = vadd.f32 %v786, %v967
      %v969 = vpop.f32.mrb[0].mxu0
      %970 = vmatprep.mubr.f32.mxu0 0.0
      %v971 = vand.u32 %v267, 4294901760
      %v972 = vsub.f32 %v267, %v971
      %v973 = vand.u32 %v972, 4294901760
      %974 = vmatmul.mubr.f32.gmra.mrb[0].mxu0 %v973
      %v975 = vpop.f32.mrb[0].mxu0
      %v976 = vadd.f32 %v793, %v975
      %v977 = vpop.f32.mrb[0].mxu0
      %978 = vmatprep.mubr.f32.mxu0 0.0
      %v979 = vand.u32 %v270, 4294901760
      %v980 = vsub.f32 %v270, %v979
      %v981 = vand.u32 %v980, 4294901760
      %982 = vmatmul.mubr.f32.gmra.mrb[0].mxu0 %v981
      %v983 = vpop.f32.mrb[0].mxu0
      %v984 = vadd.f32 %v800, %v983
      %v985 = vpop.f32.mrb[0].mxu0
      %986 = vmatprep.mubr.f32.mxu0 0.0
      %v987 = vand.u32 %v273, 4294901760
      %v988 = vsub.f32 %v273, %v987
      %v989 = vand.u32 %v988, 4294901760
      %990 = vmatmul.mubr.f32.gmra.mrb[0].mxu0 %v989
      %v991 = vpop.f32.mrb[0].mxu0
      %v992 = vadd.f32 %v807, %v991
      %v993 = vpop.f32.mrb[0].mxu0
      %994 = vmatprep.mubr.f32.mxu0 0.0
      %v995 = vand.u32 %v276, 4294901760
      %v996 = vsub.f32 %v276, %v995
      %v997 = vand.u32 %v996, 4294901760
      %998 = vmatmul.mubr.f32.gmra.mrb[0].mxu0 %v997
      %v999 = vpop.f32.mrb[0].mxu0
      %v1000 = vadd.f32 %v814, %v999
      %v1001 = vpop.f32.mrb[0].mxu0
      %1002 = vmatprep.mubr.f32.mxu0 0.0
      %v1003 = vand.u32 %v279, 4294901760
      %v1004 = vsub.f32 %v279, %v1003
      %v1005 = vand.u32 %v1004, 4294901760
      %1006 = vmatmul.mubr.f32.gmra.mrb[0].mxu0 %v1005
      %v1007 = vpop.f32.mrb[0].mxu0
      %v1008 = vadd.f32 %v821, %v1007
      %v1009 = vpop.f32.mrb[0].mxu0
      %1010 = vmatprep.mubr.f32.mxu0 0.0
      %v1011 = vand.u32 %v282, 4294901760
      %v1012 = vsub.f32 %v282, %v1011
      %v1013 = vand.u32 %v1012, 4294901760
      %1014 = vmatmul.mubr.f32.gmra.mrb[0].mxu0 %v1013
      %v1015 = vpop.f32.mrb[0].mxu0
      %v1016 = vadd.f32 %v828, %v1015
      %v1017 = vpop.f32.mrb[0].mxu0
      %1018 = vmatprep.mubr.f32.mxu0 0.0
      %v1019 = vand.u32 %v285, 4294901760
      %v1020 = vsub.f32 %v285, %v1019
      %v1021 = vand.u32 %v1020, 4294901760
      %1022 = vmatmul.mubr.f32.gmra.mrb[0].mxu0 %v1021
      %v1023 = vpop.f32.mrb[0].mxu0
      %v1024 = vadd.f32 %v835, %v1023
      %v1025 = vpop.f32.mrb[0].mxu0
      %1026 = vmatprep.mubr.f32.mxu0 0.0
      %v1027 = vand.u32 %v288, 4294901760
      %v1028 = vsub.f32 %v288, %v1027
      %v1029 = vand.u32 %v1028, 4294901760
      %1030 = vmatmul.mubr.f32.gmra.mrb[0].mxu0 %v1029
      %v1031 = vpop.f32.mrb[0].mxu0
      %v1032 = vadd.f32 %v842, %v1031
      %v1033 = vpop.f32.mrb[0].mxu0
      %1034 = vmatprep.mubr.f32.mxu0 0.0
      %v1035 = vand.u32 %v291, 4294901760
      %v1036 = vsub.f32 %v291, %v1035
      %v1037 = vand.u32 %v1036, 4294901760
      %1038 = vmatmul.mubr.f32.gmra.mrb[0].mxu0 %v1037
      %v1039 = vpop.f32.mrb[0].mxu0
      %v1040 = vadd.f32 %v849, %v1039
      %v1041 = vpop.f32.mrb[0].mxu0
      %1042 = vmatprep.mubr.f32.mxu0 0.0
      %v1043 = vand.u32 %v294, 4294901760
      %v1044 = vsub.f32 %v294, %v1043
      %v1045 = vand.u32 %v1044, 4294901760
      %1046 = vmatmul.mubr.f32.gmra.mrb[0].mxu0 %v1045
      %v1047 = vpop.f32.mrb[0].mxu0
      %v1048 = vadd.f32 %v856, %v1047
      %v1049 = vpop.f32.mrb[0].mxu0
      %1050 = vmatprep.mubr.f32.mxu0 0.0
      %v1051 = vand.u32 %v297, 4294901760
      %v1052 = vsub.f32 %v297, %v1051
      %v1053 = vand.u32 %v1052, 4294901760
      %1054 = vmatmul.mubr.f32.gmra.mrb[0].mxu0 %v1053
      %v1055 = vpop.f32.mrb[0].mxu0
      %v1056 = vadd.f32 %v863, %v1055
      %v1057 = vpop.f32.mrb[0].mxu0
      %1058 = vmatprep.mubr.f32.mxu0 0.0
      %v1059 = vand.u32 %v300, 4294901760
      %v1060 = vsub.f32 %v300, %v1059
      %v1061 = vand.u32 %v1060, 4294901760
      %1062 = vmatmul.mubr.f32.gmra.mrb[0].mxu0 %v1061
      %v1063 = vpop.f32.mrb[0].mxu0
      %v1064 = vadd.f32 %v870, %v1063
      %v1065 = vpop.f32.mrb[0].mxu0
      %1066 = vdwg.mxu0
      %1067 = vmatprep.subr.mxu0 0.0
      %v1068 = vand.u32 %v252, 4294901760
      %v1069 = vsub.f32 %v252, %v1068
      %v1070 = vand.u32 %v1069, 4294901760
      %1071 = vmatpush1.msra.mxu0 %v1070
      %1072 = vmatprep.subr.mxu0 0.0
      %1073 = vmatpush1.msra.mxu0 0.0
      %1074 = vmatprep.subr.mxu0 0.0
      %1075 = vmatpush1.msra.mxu0 0.0
      %1076 = vmatprep.subr.mxu0 0.0
      %1077 = vmatpush1.msra.mxu0 0.0
      %1078 = vmatprep.subr.mxu0 0.0
      %1079 = vmatpush1.msra.mxu0 0.0
      %1080 = vmatprep.subr.mxu0 0.0
      %1081 = vmatpush1.msra.mxu0 0.0
      %1082 = vmatprep.subr.mxu0 0.0
      %1083 = vmatpush1.msra.mxu0 0.0
      %1084 = vmatprep.subr.mxu0 0.0
      %1085 = vmatpush1.msra.mxu0 0.0
      %1086 = vmatprep.subr.mxu0 0.0
      %1087 = vmatpush1.msra.mxu0 0.0
      %1088 = vmatprep.subr.mxu0 0.0
      %1089 = vmatpush1.msra.mxu0 0.0
      %1090 = vmatprep.subr.mxu0 0.0
      %1091 = vmatpush1.msra.mxu0 0.0
      %1092 = vmatprep.subr.mxu0 0.0
      %1093 = vmatpush1.msra.mxu0 0.0
      %1094 = vmatprep.subr.mxu0 0.0
      %1095 = vmatpush1.msra.mxu0 0.0
      %1096 = vmatprep.subr.mxu0 0.0
      %1097 = vmatpush1.msra.mxu0 0.0
      %1098 = vmatprep.subr.mxu0 0.0
      %1099 = vmatpush1.msra.mxu0 0.0
      %1100 = vmatprep.subr.mxu0 0.0
      %1101 = vmatpush1.msra.mxu0 0.0
      %1102 = vmatprep.subr.mxu0 0.0
      %1103 = vmatpush1.msra.mxu0 0.0
      %1104 = vmatprep.subr.mxu0 0.0
      %1105 = vmatpush1.msra.mxu0 0.0
      %1106 = vmatprep.subr.mxu0 0.0
      %1107 = vmatpush1.msra.mxu0 0.0
      %1108 = vmatprep.subr.mxu0 0.0
      %1109 = vmatpush1.msra.mxu0 0.0
      %1110 = vmatprep.subr.mxu0 0.0
      %1111 = vmatpush1.msra.mxu0 0.0
      %1112 = vmatprep.subr.mxu0 0.0
      %1113 = vmatpush1.msra.mxu0 0.0
      %1114 = vmatprep.subr.mxu0 0.0
      %1115 = vmatpush1.msra.mxu0 0.0
      %1116 = vmatprep.subr.mxu0 0.0
      %1117 = vmatpush1.msra.mxu0 0.0
      %1118 = vmatprep.subr.mxu0 0.0
      %1119 = vmatpush1.msra.mxu0 0.0
      %1120 = vmatprep.subr.mxu0 0.0
      %1121 = vmatpush1.msra.mxu0 0.0
      %1122 = vmatprep.subr.mxu0 0.0
      %1123 = vmatpush1.msra.mxu0 0.0
      %1124 = vmatprep.subr.mxu0 0.0
      %1125 = vmatpush1.msra.mxu0 0.0
      %1126 = vmatprep.subr.mxu0 0.0
      %1127 = vmatpush1.msra.mxu0 0.0
      %1128 = vmatprep.subr.mxu0 0.0
      %1129 = vmatpush1.msra.mxu0 0.0
      %1130 = vmatprep.subr.mxu0 0.0
      %1131 = vmatpush1.msra.mxu0 0.0
      %1132 = vmatprep.subr.mxu0 0.0
      %1133 = vmatpush1.msra.mxu0 0.0
      %1134 = vmatprep.mubr.f32.mxu0 0.0
      %v1135 = vand.u32 %v255, 4294901760
      %1136 = vmatmul.mubr.f32.gmra.mrb[0].mxu0 %v1135
      %v1137 = vpop.f32.mrb[0].mxu0
      %v1138 = vadd.f32 %v944, %v1137
      %v1139 = vpop.f32.mrb[0].mxu0
      %1140 = vmatprep.mubr.f32.mxu0 0.0
      %v1141 = vand.u32 %v258, 4294901760
      %1142 = vmatmul.mubr.f32.gmra.mrb[0].mxu0 %v1141
      %v1143 = vpop.f32.mrb[0].mxu0
      %v1144 = vadd.f32 %v952, %v1143
      %v1145 = vpop.f32.mrb[0].mxu0
      %1146 = vmatprep.mubr.f32.mxu0 0.0
      %v1147 = vand.u32 %v261, 4294901760
      %1148 = vmatmul.mubr.f32.gmra.mrb[0].mxu0 %v1147
      %v1149 = vpop.f32.mrb[0].mxu0
      %v1150 = vadd.f32 %v960, %v1149
      %v1151 = vpop.f32.mrb[0].mxu0
      %1152 = vmatprep.mubr.f32.mxu0 0.0
      %v1153 = vand.u32 %v264, 4294901760
      %1154 = vmatmul.mubr.f32.gmra.mrb[0].mxu0 %v1153
      %v1155 = vpop.f32.mrb[0].mxu0
      %v1156 = vadd.f32 %v968, %v1155
      %v1157 = vpop.f32.mrb[0].mxu0
      %1158 = vmatprep.mubr.f32.mxu0 0.0
      %v1159 = vand.u32 %v267, 4294901760
      %1160 = vmatmul.mubr.f32.gmra.mrb[0].mxu0 %v1159
      %v1161 = vpop.f32.mrb[0].mxu0
      %v1162 = vadd.f32 %v976, %v1161
      %v1163 = vpop.f32.mrb[0].mxu0
      %1164 = vmatprep.mubr.f32.mxu0 0.0
      %v1165 = vand.u32 %v270, 4294901760
      %1166 = vmatmul.mubr.f32.gmra.mrb[0].mxu0 %v1165
      %v1167 = vpop.f32.mrb[0].mxu0
      %v1168 = vadd.f32 %v984, %v1167
      %v1169 = vpop.f32.mrb[0].mxu0
      %1170 = vmatprep.mubr.f32.mxu0 0.0
      %v1171 = vand.u32 %v273, 4294901760
      %1172 = vmatmul.mubr.f32.gmra.mrb[0].mxu0 %v1171
      %v1173 = vpop.f32.mrb[0].mxu0
      %v1174 = vadd.f32 %v992, %v1173
      %v1175 = vpop.f32.mrb[0].mxu0
      %1176 = vmatprep.mubr.f32.mxu0 0.0
      %v1177 = vand.u32 %v276, 4294901760
      %1178 = vmatmul.mubr.f32.gmra.mrb[0].mxu0 %v1177
      %v1179 = vpop.f32.mrb[0].mxu0
      %v1180 = vadd.f32 %v1000, %v1179
      %v1181 = vpop.f32.mrb[0].mxu0
      %1182 = vmatprep.mubr.f32.mxu0 0.0
      %v1183 = vand.u32 %v279, 4294901760
      %1184 = vmatmul.mubr.f32.gmra.mrb[0].mxu0 %v1183
      %v1185 = vpop.f32.mrb[0].mxu0
      %v1186 = vadd.f32 %v1008, %v1185
      %v1187 = vpop.f32.mrb[0].mxu0
      %1188 = vmatprep.mubr.f32.mxu0 0.0
      %v1189 = vand.u32 %v282, 4294901760
      %1190 = vmatmul.mubr.f32.gmra.mrb[0].mxu0 %v1189
      %v1191 = vpop.f32.mrb[0].mxu0
      %v1192 = vadd.f32 %v1016, %v1191
      %v1193 = vpop.f32.mrb[0].mxu0
      %1194 = vmatprep.mubr.f32.mxu0 0.0
      %v1195 = vand.u32 %v285, 4294901760
      %1196 = vmatmul.mubr.f32.gmra.mrb[0].mxu0 %v1195
      %v1197 = vpop.f32.mrb[0].mxu0
      %v1198 = vadd.f32 %v1024, %v1197
      %v1199 = vpop.f32.mrb[0].mxu0
      %1200 = vmatprep.mubr.f32.mxu0 0.0
      %v1201 = vand.u32 %v288, 4294901760
      %1202 = vmatmul.mubr.f32.gmra.mrb[0].mxu0 %v1201
      %v1203 = vpop.f32.mrb[0].mxu0
      %v1204 = vadd.f32 %v1032, %v1203
      %v1205 = vpop.f32.mrb[0].mxu0
      %1206 = vmatprep.mubr.f32.mxu0 0.0
      %v1207 = vand.u32 %v291, 4294901760
      %1208 = vmatmul.mubr.f32.gmra.mrb[0].mxu0 %v1207
      %v1209 = vpop.f32.mrb[0].mxu0
      %v1210 = vadd.f32 %v1040, %v1209
      %v1211 = vpop.f32.mrb[0].mxu0
      %1212 = vmatprep.mubr.f32.mxu0 0.0
      %v1213 = vand.u32 %v294, 4294901760
      %1214 = vmatmul.mubr.f32.gmra.mrb[0].mxu0 %v1213
      %v1215 = vpop.f32.mrb[0].mxu0
      %v1216 = vadd.f32 %v1048, %v1215
      %v1217 = vpop.f32.mrb[0].mxu0
      %1218 = vmatprep.mubr.f32.mxu0 0.0
      %v1219 = vand.u32 %v297, 4294901760
      %1220 = vmatmul.mubr.f32.gmra.mrb[0].mxu0 %v1219
      %v1221 = vpop.f32.mrb[0].mxu0
      %v1222 = vadd.f32 %v1056, %v1221
      %v1223 = vpop.f32.mrb[0].mxu0
      %1224 = vmatprep.mubr.f32.mxu0 0.0
      %v1225 = vand.u32 %v300, 4294901760
      %1226 = vmatmul.mubr.f32.gmra.mrb[0].mxu0 %v1225
      %v1227 = vpop.f32.mrb[0].mxu0
      %v1228 = vadd.f32 %v1064, %v1227
      %v1229 = vpop.f32.mrb[0].mxu0
      %1230 = vdwg.mxu0
      %1231 = vmatprep.subr.mxu0 0.0
      %v1232 = vand.u32 %v252, 4294901760
      %1233 = vmatpush1.msra.mxu0 %v1232
      %1234 = vmatprep.subr.mxu0 0.0
      %1235 = vmatpush1.msra.mxu0 0.0
      %1236 = vmatprep.subr.mxu0 0.0
      %1237 = vmatpush1.msra.mxu0 0.0
      %1238 = vmatprep.subr.mxu0 0.0
      %1239 = vmatpush1.msra.mxu0 0.0
      %1240 = vmatprep.subr.mxu0 0.0
      %1241 = vmatpush1.msra.mxu0 0.0
      %1242 = vmatprep.subr.mxu0 0.0
      %1243 = vmatpush1.msra.mxu0 0.0
      %1244 = vmatprep.subr.mxu0 0.0
      %1245 = vmatpush1.msra.mxu0 0.0
      %1246 = vmatprep.subr.mxu0 0.0
      %1247 = vmatpush1.msra.mxu0 0.0
      %1248 = vmatprep.subr.mxu0 0.0
      %1249 = vmatpush1.msra.mxu0 0.0
      %1250 = vmatprep.subr.mxu0 0.0
      %1251 = vmatpush1.msra.mxu0 0.0
      %1252 = vmatprep.subr.mxu0 0.0
      %1253 = vmatpush1.msra.mxu0 0.0
      %1254 = vmatprep.subr.mxu0 0.0
      %1255 = vmatpush1.msra.mxu0 0.0
      %1256 = vmatprep.subr.mxu0 0.0
      %1257 = vmatpush1.msra.mxu0 0.0
      %1258 = vmatprep.subr.mxu0 0.0
      %1259 = vmatpush1.msra.mxu0 0.0
      %1260 = vmatprep.subr.mxu0 0.0
      %1261 = vmatpush1.msra.mxu0 0.0
      %1262 = vmatprep.subr.mxu0 0.0
      %1263 = vmatpush1.msra.mxu0 0.0
      %1264 = vmatprep.subr.mxu0 0.0
      %1265 = vmatpush1.msra.mxu0 0.0
      %1266 = vmatprep.subr.mxu0 0.0
      %1267 = vmatpush1.msra.mxu0 0.0
      %1268 = vmatprep.subr.mxu0 0.0
      %1269 = vmatpush1.msra.mxu0 0.0
      %1270 = vmatprep.subr.mxu0 0.0
      %1271 = vmatpush1.msra.mxu0 0.0
      %1272 = vmatprep.subr.mxu0 0.0
      %1273 = vmatpush1.msra.mxu0 0.0
      %1274 = vmatprep.subr.mxu0 0.0
      %1275 = vmatpush1.msra.mxu0 0.0
      %1276 = vmatprep.subr.mxu0 0.0
      %1277 = vmatpush1.msra.mxu0 0.0
      %1278 = vmatprep.subr.mxu0 0.0
      %1279 = vmatpush1.msra.mxu0 0.0
      %1280 = vmatprep.subr.mxu0 0.0
      %1281 = vmatpush1.msra.mxu0 0.0
      %1282 = vmatprep.subr.mxu0 0.0
      %1283 = vmatpush1.msra.mxu0 0.0
      %1284 = vmatprep.subr.mxu0 0.0
      %1285 = vmatpush1.msra.mxu0 0.0
      %1286 = vmatprep.subr.mxu0 0.0
      %1287 = vmatpush1.msra.mxu0 0.0
      %1288 = vmatprep.subr.mxu0 0.0
      %1289 = vmatpush1.msra.mxu0 0.0
      %1290 = vmatprep.subr.mxu0 0.0
      %1291 = vmatpush1.msra.mxu0 0.0
      %1292 = vmatprep.subr.mxu0 0.0
      %1293 = vmatpush1.msra.mxu0 0.0
      %1294 = vmatprep.subr.mxu0 0.0
      %1295 = vmatpush1.msra.mxu0 0.0
      %1296 = vmatprep.mubr.f32.mxu0 0.0
      %v1297 = vand.u32 %v255, 4294901760
      %1298 = vmatmul.mubr.f32.gmra.mrb[0].mxu0 %v1297
      %v1299 = vpop.f32.mrb[0].mxu0
      %v1300 = vadd.f32 %v1138, %v1299
      %v1301 = vpop.f32.mrb[0].mxu0
      %1302 = vmatprep.mubr.f32.mxu0 0.0
      %v1303 = vand.u32 %v258, 4294901760
      %1304 = vmatmul.mubr.f32.gmra.mrb[0].mxu0 %v1303
      %v1305 = vpop.f32.mrb[0].mxu0
      %v1306 = vadd.f32 %v1144, %v1305
      %v1307 = vpop.f32.mrb[0].mxu0
      %1308 = vmatprep.mubr.f32.mxu0 0.0
      %v1309 = vand.u32 %v261, 4294901760
      %1310 = vmatmul.mubr.f32.gmra.mrb[0].mxu0 %v1309
      %v1311 = vpop.f32.mrb[0].mxu0
      %v1312 = vadd.f32 %v1150, %v1311
      %v1313 = vpop.f32.mrb[0].mxu0
      %1314 = vmatprep.mubr.f32.mxu0 0.0
      %v1315 = vand.u32 %v264, 4294901760
      %1316 = vmatmul.mubr.f32.gmra.mrb[0].mxu0 %v1315
      %v1317 = vpop.f32.mrb[0].mxu0
      %v1318 = vadd.f32 %v1156, %v1317
      %v1319 = vpop.f32.mrb[0].mxu0
      %1320 = vmatprep.mubr.f32.mxu0 0.0
      %v1321 = vand.u32 %v267, 4294901760
      %1322 = vmatmul.mubr.f32.gmra.mrb[0].mxu0 %v1321
      %v1323 = vpop.f32.mrb[0].mxu0
      %v1324 = vadd.f32 %v1162, %v1323
      %v1325 = vpop.f32.mrb[0].mxu0
      %1326 = vmatprep.mubr.f32.mxu0 0.0
      %v1327 = vand.u32 %v270, 4294901760
      %1328 = vmatmul.mubr.f32.gmra.mrb[0].mxu0 %v1327
      %v1329 = vpop.f32.mrb[0].mxu0
      %v1330 = vadd.f32 %v1168, %v1329
      %v1331 = vpop.f32.mrb[0].mxu0
      %1332 = vmatprep.mubr.f32.mxu0 0.0
      %v1333 = vand.u32 %v273, 4294901760
      %1334 = vmatmul.mubr.f32.gmra.mrb[0].mxu0 %v1333
      %v1335 = vpop.f32.mrb[0].mxu0
      %v1336 = vadd.f32 %v1174, %v1335
      %v1337 = vpop.f32.mrb[0].mxu0
      %1338 = vmatprep.mubr.f32.mxu0 0.0
      %v1339 = vand.u32 %v276, 4294901760
      %1340 = vmatmul.mubr.f32.gmra.mrb[0].mxu0 %v1339
      %v1341 = vpop.f32.mrb[0].mxu0
      %v1342 = vadd.f32 %v1180, %v1341
      %v1343 = vpop.f32.mrb[0].mxu0
      %1344 = vmatprep.mubr.f32.mxu0 0.0
      %v1345 = vand.u32 %v279, 4294901760
      %1346 = vmatmul.mubr.f32.gmra.mrb[0].mxu0 %v1345
      %v1347 = vpop.f32.mrb[0].mxu0
      %v1348 = vadd.f32 %v1186, %v1347
      %v1349 = vpop.f32.mrb[0].mxu0
      %1350 = vmatprep.mubr.f32.mxu0 0.0
      %v1351 = vand.u32 %v282, 4294901760
      %1352 = vmatmul.mubr.f32.gmra.mrb[0].mxu0 %v1351
      %v1353 = vpop.f32.mrb[0].mxu0
      %v1354 = vadd.f32 %v1192, %v1353
      %v1355 = vpop.f32.mrb[0].mxu0
      %1356 = vmatprep.mubr.f32.mxu0 0.0
      %v1357 = vand.u32 %v285, 4294901760
      %1358 = vmatmul.mubr.f32.gmra.mrb[0].mxu0 %v1357
      %v1359 = vpop.f32.mrb[0].mxu0
      %v1360 = vadd.f32 %v1198, %v1359
      %v1361 = vpop.f32.mrb[0].mxu0
      %1362 = vmatprep.mubr.f32.mxu0 0.0
      %v1363 = vand.u32 %v288, 4294901760
      %1364 = vmatmul.mubr.f32.gmra.mrb[0].mxu0 %v1363
      %v1365 = vpop.f32.mrb[0].mxu0
      %v1366 = vadd.f32 %v1204, %v1365
      %v1367 = vpop.f32.mrb[0].mxu0
      %1368 = vmatprep.mubr.f32.mxu0 0.0
      %v1369 = vand.u32 %v291, 4294901760
      %1370 = vmatmul.mubr.f32.gmra.mrb[0].mxu0 %v1369
      %v1371 = vpop.f32.mrb[0].mxu0
      %v1372 = vadd.f32 %v1210, %v1371
      %v1373 = vpop.f32.mrb[0].mxu0
      %1374 = vmatprep.mubr.f32.mxu0 0.0
      %v1375 = vand.u32 %v294, 4294901760
      %1376 = vmatmul.mubr.f32.gmra.mrb[0].mxu0 %v1375
      %v1377 = vpop.f32.mrb[0].mxu0
      %v1378 = vadd.f32 %v1216, %v1377
      %v1379 = vpop.f32.mrb[0].mxu0
      %1380 = vmatprep.mubr.f32.mxu0 0.0
      %v1381 = vand.u32 %v297, 4294901760
      %1382 = vmatmul.mubr.f32.gmra.mrb[0].mxu0 %v1381
      %v1383 = vpop.f32.mrb[0].mxu0
      %v1384 = vadd.f32 %v1222, %v1383
      %v1385 = vpop.f32.mrb[0].mxu0
      %1386 = vmatprep.mubr.f32.mxu0 0.0
      %v1387 = vand.u32 %v300, 4294901760
      %1388 = vmatmul.mubr.f32.gmra.mrb[0].mxu0 %v1387
      %v1389 = vpop.f32.mrb[0].mxu0
      %v1390 = vadd.f32 %v1228, %v1389
      %v1391 = vpop.f32.mrb[0].mxu0
      %1392 = vdwg.mxu0
      %v1393 = vld [vmem:[#allocation2] sm:$0xff]
      %v1394 = vld [vmem:[#allocation2 + $0x8] sm:$0xff]
      %v1395 = vld [vmem:[#allocation2 + $0x10] sm:$0xff]
      %v1396 = vld [vmem:[#allocation2 + $0x18] sm:$0xff]
      %v1397 = vld [vmem:[#allocation2 + $0x20] sm:$0xff]
      %v1398 = vld [vmem:[#allocation2 + $0x28] sm:$0xff]
      %v1399 = vld [vmem:[#allocation2 + $0x30] sm:$0xff]
      %v1400 = vld [vmem:[#allocation2 + $0x38] sm:$0xff]
      %v1401 = vld [vmem:[#allocation2 + $0x40] sm:$0xff]
      %v1402 = vld [vmem:[#allocation2 + $0x48] sm:$0xff]
      %v1403 = vld [vmem:[#allocation2 + $0x50] sm:$0xff]
      %v1404 = vld [vmem:[#allocation2 + $0x58] sm:$0xff]
      %v1405 = vld [vmem:[#allocation2 + $0x60] sm:$0xff]
      %v1406 = vld [vmem:[#allocation2 + $0x68] sm:$0xff]
      %v1407 = vld [vmem:[#allocation2 + $0x70] sm:$0xff]
      %v1408 = vld [vmem:[#allocation2 + $0x78] sm:$0xff]
      %v1409 = vmin.f32 %v1393, %v1300
      %v1410 = vmin.f32 %v1394, %v1306
      %v1411 = vmin.f32 %v1395, %v1312
      %v1412 = vmin.f32 %v1396, %v1318
      %v1413 = vmin.f32 %v1397, %v1324
      %v1414 = vmin.f32 %v1398, %v1330
      %v1415 = vmin.f32 %v1399, %v1336
      %v1416 = vmin.f32 %v1400, %v1342
      %v1417 = vmin.f32 %v1401, %v1348
      %v1418 = vmin.f32 %v1402, %v1354
      %v1419 = vmin.f32 %v1403, %v1360
      %v1420 = vmin.f32 %v1404, %v1366
      %v1421 = vmin.f32 %v1405, %v1372
      %v1422 = vmin.f32 %v1406, %v1378
      %v1423 = vmin.f32 %v1407, %v1384
      %v1424 = vmin.f32 %v1408, %v1390
      %1425 = vst [vmem:[#allocation2] sm:$0xff] %v1409
      %1426 = vst [vmem:[#allocation2 + $0x8] sm:$0xff] %v1410
      %1427 = vst [vmem:[#allocation2 + $0x10] sm:$0xff] %v1411
      %1428 = vst [vmem:[#allocation2 + $0x18] sm:$0xff] %v1412
      %1429 = vst [vmem:[#allocation2 + $0x20] sm:$0xff] %v1413
      %1430 = vst [vmem:[#allocation2 + $0x28] sm:$0xff] %v1414
      %1431 = vst [vmem:[#allocation2 + $0x30] sm:$0xff] %v1415
      %1432 = vst [vmem:[#allocation2 + $0x38] sm:$0xff] %v1416
      %1433 = vst [vmem:[#allocation2 + $0x40] sm:$0xff] %v1417
      %1434 = vst [vmem:[#allocation2 + $0x48] sm:$0xff] %v1418
      %1435 = vst [vmem:[#allocation2 + $0x50] sm:$0xff] %v1419
      %1436 = vst [vmem:[#allocation2 + $0x58] sm:$0xff] %v1420
      %1437 = vst [vmem:[#allocation2 + $0x60] sm:$0xff] %v1421
      %1438 = vst [vmem:[#allocation2 + $0x68] sm:$0xff] %v1422
      %1439 = vst [vmem:[#allocation2 + $0x70] sm:$0xff] %v1423
      %1440 = vst [vmem:[#allocation2 + $0x78] sm:$0xff] %v1424
      %v1441 = vmin.f32 %v1300, %v1324
      %v1442 = vmin.f32 %v1306, %v1330
      %v1443 = vmin.f32 %v1312, %v1336
      %v1444 = vmin.f32 %v1318, %v1342
      %v1445 = vmin.f32 %v1441, %v1348
      %v1446 = vmin.f32 %v1442, %v1354
      %v1447 = vmin.f32 %v1443, %v1360
      %v1448 = vmin.f32 %v1444, %v1366
      %v1449 = vmin.f32 %v1445, %v1372
      %v1450 = vmin.f32 %v1446, %v1378
      %v1451 = vmin.f32 %v1447, %v1384
      %v1452 = vmin.f32 %v1448, %v1390
      %v1453 = vmin.f32 %v1449, %v1450
      %v1454 = vmin.f32 %v1451, %v1452
      %v1455 = vmin.f32 %v1453, %v1454
      %v1456 = vrot.slane %v1455, 4
      %v1457 = vmin.f32 %v1455, %v1456
      %v1458 = vrot.slane %v1457, 2
      %v1459 = vmin.f32 %v1457, %v1458
      %v1460 = vrot.slane %v1459, 1
      %v1461 = vmin.f32 %v1459, %v1460
      %s1462 = scalar_lea.vmem [#allocation3], %s20
      %v1463 = vld [vmem:[%s1462] sm:$0x1]
      %v1464 = vmin.f32 %v1463, %v1461
      %1465 = vst [vmem:[%s1462] sm:$0x1] %v1464
      // Predicated region
      $region41: #{chamfer_loss.1} parent=27 // pred_check
        %p1466 = pneg %p206
      $region42: #{chamfer_loss.1} parent=27 // pred_check_branch
        %1468 = sbr.rel (%p1466) target = $region44
      $region43: #{chamfer_loss.1} parent=27 // pred_region
        %v1469 = vld [vmem:[#allocation2] sm:$0xff]
        %v1470 = vld [vmem:[#allocation2 + $0x8] sm:$0xff]
        %v1471 = vld [vmem:[#allocation2 + $0x10] sm:$0xff]
        %v1472 = vld [vmem:[#allocation2 + $0x18] sm:$0xff]
        %v1473 = vld [vmem:[#allocation2 + $0x20] sm:$0xff]
        %v1474 = vld [vmem:[#allocation2 + $0x28] sm:$0xff]
        %v1475 = vld [vmem:[#allocation2 + $0x30] sm:$0xff]
        %v1476 = vld [vmem:[#allocation2 + $0x38] sm:$0xff]
        %v1477 = vld [vmem:[#allocation2 + $0x40] sm:$0xff]
        %v1478 = vld [vmem:[#allocation2 + $0x48] sm:$0xff]
        %v1479 = vld [vmem:[#allocation2 + $0x50] sm:$0xff]
        %v1480 = vld [vmem:[#allocation2 + $0x58] sm:$0xff]
        %v1481 = vld [vmem:[#allocation2 + $0x60] sm:$0xff]
        %v1482 = vld [vmem:[#allocation2 + $0x68] sm:$0xff]
        %v1483 = vld [vmem:[#allocation2 + $0x70] sm:$0xff]
        %v1484 = vld [vmem:[#allocation2 + $0x78] sm:$0xff]
        %1485 = vmin.xlane.f32.xlu0 %v1469
        %v1486 = vpop.xlane.xlu0 %1485
        %1487 = vmin.xlane.f32.xlu0 %v1470
        %v1488 = vpop.xlane.xlu0 %1487
        %1489 = vmin.xlane.f32.xlu0 %v1471
        %v1490 = vpop.xlane.xlu0 %1489
        %1491 = vmin.xlane.f32.xlu0 %v1472
        %v1492 = vpop.xlane.xlu0 %1491
        %1493 = vmin.xlane.f32.xlu0 %v1473
        %v1494 = vpop.xlane.xlu0 %1493
        %1495 = vmin.xlane.f32.xlu0 %v1474
        %v1496 = vpop.xlane.xlu0 %1495
        %1497 = vmin.xlane.f32.xlu0 %v1475
        %v1498 = vpop.xlane.xlu0 %1497
        %1499 = vmin.xlane.f32.xlu0 %v1476
        %v1500 = vpop.xlane.xlu0 %1499
        %1501 = vmin.xlane.f32.xlu0 %v1477
        %v1502 = vpop.xlane.xlu0 %1501
        %1503 = vmin.xlane.f32.xlu0 %v1478
        %v1504 = vpop.xlane.xlu0 %1503
        %1505 = vmin.xlane.f32.xlu0 %v1479
        %v1506 = vpop.xlane.xlu0 %1505
        %1507 = vmin.xlane.f32.xlu0 %v1480
        %v1508 = vpop.xlane.xlu0 %1507
        %1509 = vmin.xlane.f32.xlu0 %v1481
        %v1510 = vpop.xlane.xlu0 %1509
        %1511 = vmin.xlane.f32.xlu0 %v1482
        %v1512 = vpop.xlane.xlu0 %1511
        %1513 = vmin.xlane.f32.xlu0 %v1483
        %v1514 = vpop.xlane.xlu0 %1513
        %1515 = vmin.xlane.f32.xlu0 %v1484
        %v1516 = vpop.xlane.xlu0 %1515
        %v1517 = vadd.f32 %v1486, %v1488
        %v1518 = vadd.f32 %v1517, %v1490
        %v1519 = vadd.f32 %v1518, %v1492
        %v1520 = vadd.f32 %v1519, %v1494
        %v1521 = vadd.f32 %v1520, %v1496
        %v1522 = vadd.f32 %v1521, %v1498
        %v1523 = vadd.f32 %v1522, %v1500
        %v1524 = vadd.f32 %v1523, %v1502
        %v1525 = vadd.f32 %v1524, %v1504
        %v1526 = vadd.f32 %v1525, %v1506
        %v1527 = vadd.f32 %v1526, %v1508
        %v1528 = vadd.f32 %v1527, %v1510
        %v1529 = vadd.f32 %v1528, %v1512
        %v1530 = vadd.f32 %v1529, %v1514
        %v1531 = vadd.f32 %v1530, %v1516
        %v1532 = vrot.slane %v1531, 4
        %v1533 = vadd.f32 %v1531, %v1532
        %v1534 = vrot.slane %v1533, 2
        %v1535 = vadd.f32 %v1533, %v1534
        %v1536 = vrot.slane %v1535, 1
        %v1537 = vadd.f32 %v1535, %v1536
        %v1538 = vld [vmem:[%s204 + $0x1] sm:$0x1]
        %v1539 = vadd.f32 %v1538, %v1537
        %1540 = vst [vmem:[%s204 + $0x1] sm:$0x1] %v1539
      $region44: #{chamfer_loss.1} parent=27 // pred_fallthru
        _
      // Predicated region
      $region45: #{chamfer_loss.1} parent=27 // pred_check
        %p1541 = pneg %p205
      $region46: #{chamfer_loss.1} parent=27 // pred_check_branch
        %1543 = sbr.rel (%p1541) target = $region48
      $region47: #{chamfer_loss.1} parent=27 // pred_region
        %v1544 = vld [vmem:[%s1462] sm:$0x1]
        %vm1545 = vcmask 1040384
        %v1546 = vsel %vm1545, %v1544, 0.0
        %1547 = vadd.xlane.f32.xlu0 %v1546
        %v1548 = vpop.xlane.xlu0 %1547
        %v1549 = vld [vmem:[%s204] sm:$0x1]
        %v1550 = vadd.f32 %v1549, %v1548
        %1551 = vst [vmem:[%s204] sm:$0x1] %v1550
      $region48: #{chamfer_loss.1} parent=27 // pred_fallthru
        _
      %p1552 = scmp.lt.s32.totalorder %s18, 1
      %s1553 = scalar_select %p1552, %s18, 1
      %s1554 = smul.addr %s1553, 2
      %s1555 = scalar_lea.vmem %s2, %s1554
      // Predicated region
      $region49: #{chamfer_loss.1} parent=27 // pred_check
        %p1556 = pneg %p106
      $region50: #{chamfer_loss.1} parent=27 // pred_check_branch
        %1558 = sbr.rel (%p1556) target = $region52
      $region51: #{chamfer_loss.1} parent=27 // pred_region
        _
      $region52: #{chamfer_loss.1} parent=27 // pred_fallthru
        _
    $region28: #{chamfer_loss.1} parent=5 // pred_fallthru
      _
    %p1559 = scmp.le.s32.totalorder 2, %s8
    // Predicated region
    $region53: #{chamfer_loss.1} parent=5 // pred_check
      %p1560 = pneg %p1559
    $region54: #{chamfer_loss.1} parent=5 // pred_check_branch
      %1562 = sbr.rel (%p1560) target = $region56
    $region55: #{chamfer_loss.1} parent=5 // pred_region
      %s1563 = ssub.s32 %s8, 2
      // Predicated region
      $region57: #{chamfer_loss.1} parent=55 // pred_check
        %p1564 = pneg %p112
      $region58: #{chamfer_loss.1} parent=55 // pred_check_branch
        %1566 = sbr.rel (%p1564) target = $region60
      $region59: #{chamfer_loss.1} parent=55 // pred_region
        %p1567 = scmp.lt.s32.totalorder %s21, 1
        %s1568 = scalar_select %p1567, %s21, 1
        %s1569 = smul.addr %s1568, 2
        %s1570 = scalar_lea.vmem %s2, %s1569
      $region60: #{chamfer_loss.1} parent=55 // pred_fallthru
        _
    $region56: #{chamfer_loss.1} parent=5 // pred_fallthru
      _
  $region6: #{chamfer_loss.1} parent=0 // loop_footer
    %s12 = sadd.s32 1, %s8
  $region7: #{chamfer_loss.1} parent=0 // loop_footer_branch
    %7 = sbr.rel target = $region3
  $region8: #{chamfer_loss.1} parent=0 // loop_exit
    _

</llo_original>
